<compile_context>
chip_gen: v7x
topology: tpu7x:2x2x1
jax: 0.10.0
libtpu: 0.0.40
codegen_flags: <defaults>
</compile_context>

<pallas_src>
import math
import functools

import jax
import jax.numpy as jnp
from jax.experimental import pallas as pl
from jax.experimental.pallas import tpu as pltpu


# Defensive alias: older jax spells this TPUCompilerParams.
_CompilerParams = getattr(pltpu, "CompilerParams", None) or getattr(
    pltpu, "TPUCompilerParams")

PACKED_PARAM_ORDER = ["wqkv", "bqkv", "wo", "bo", "g1", "bn1",
                      "w1", "bf1", "w2", "bf2", "g2", "bn2"]


def _layer_norm(y, gamma, beta, eps=1e-5):
    # torch.nn.LayerNorm: biased variance over last dim, eps=1e-5
    mu = jnp.mean(y, axis=-1, keepdims=True)
    var = jnp.mean((y - mu) ** 2, axis=-1, keepdims=True)
    return (y - mu) * jax.lax.rsqrt(var + eps) * gamma + beta


def encoder_layer_kernel(n_heads, head_dim, tq,
                         x_ref, bias_ref,
                         wqkv_ref, bqkv_ref, wo_ref, bo_ref,
                         g1_ref, bn1_ref, w1_ref, bf1_ref,
                         w2_ref, bf2_ref, g2_ref, bn2_ref,
                         out_ref, qh_scr, kh_scr, vh_scr):
    f32 = jnp.float32
    bf16 = jnp.bfloat16

    qi = pl.program_id(1)
    S = x_ref.shape[0]
    H = n_heads * head_dim

    # ---- once per batch element: fused QKV projection (one MXU matmul) into
    # head-major bf16 scratch, reused by every query tile of this batch. ----
    @pl.when(qi == 0)
    def _():
        x = x_ref[...]                                        # (S, H) f32
        qkv = jnp.dot(x.astype(bf16), wqkv_ref[...],
                      preferred_element_type=f32) + bqkv_ref[...]   # (S, 3H)
        inv_scale = 1.0 / math.sqrt(head_dim)
        q = qkv[:, 0 * H:1 * H] * inv_scale   # softmax scale folded into Q
        k = qkv[:, 1 * H:2 * H]
        v = qkv[:, 2 * H:3 * H]

        # TODO(synk): for head_dim >= 128 these head-major relayouts could be
        # replaced by tile-aligned lane slices (no transposes at all).
        def to_heads(t):
            return t.reshape(S, n_heads, head_dim).transpose(1, 0, 2).astype(bf16)

        qh_scr[...] = to_heads(q)
        kh_scr[...] = to_heads(k)
        vh_scr[...] = to_heads(v)

    # ------------------------- per query tile --------------------------------
    row0 = pl.multiple_of(qi * tq, tq)
    xq = x_ref[pl.ds(row0, tq), :]                            # (tq, H) f32
    qh = qh_scr[:, pl.ds(row0, tq), :]                        # (n, tq, d) bf16

    bias = bias_ref[...]                                      # (1, S) f32, additive

    # energy stays f32 (required by the -1e10 bias); (n, tq, S) only.
    energy = jnp.einsum('nqd,nkd->nqk', qh, kh_scr[...],
                        preferred_element_type=f32)
    energy = energy + bias[None, :, :]

    # two-pass softmax over keys; keep the f32 chain short, cast to bf16 asap.
    m = jnp.max(energy, axis=-1, keepdims=True)
    p = jnp.exp(energy - m)
    denom = jnp.sum(p, axis=-1, keepdims=True)
    if hasattr(pl, "reciprocal"):
        inv = pl.reciprocal(denom, approx=True)               # EUP slot
    else:  # very old pallas fallback
        inv = 1.0 / denom
    attn = (p * inv).astype(bf16)

    ctx = jnp.einsum('nqk,nkd->nqd', attn, vh_scr[...],
                     preferred_element_type=f32)              # (n, tq, d)
    ctx = ctx.transpose(1, 0, 2).reshape(tq, H)               # (tq, H)

    attn_out = jnp.dot(ctx.astype(bf16), wo_ref[...],
                       preferred_element_type=f32) + bo_ref[...]

    # --- residual + LayerNorm 1 ---
    y = _layer_norm(xq + attn_out, g1_ref[...], bn1_ref[...])

    # --- position-wise feedforward ---
    hdn = jnp.maximum(
        jnp.dot(y.astype(bf16), w1_ref[...], preferred_element_type=f32)
        + bf1_ref[...], 0.0)
    ff = jnp.dot(hdn.astype(bf16), w2_ref[...],
                 preferred_element_type=f32) + bf2_ref[...]

    # --- residual + LayerNorm 2 ---
    out_ref[...] = _layer_norm(y + ff, g2_ref[...], bn2_ref[...])


def _choose_q_tile(S, target=256):
    """Largest multiple-of-8 divisor of S that is <= target (or S itself)."""
    if S <= target:
        return S
    t = (min(target, S) // 8) * 8
    while t >= 8:
        if S % t == 0:
            return t
        t -= 8
    return S


def _vmem_limit_bytes():
    # Per-generation scoped-VMEM budget with headroom (v5e/v6e ~112 MiB,
    # v7x ~56 MiB); falls back to 64 MiB if the query is unavailable.
    try:
        cap = int(pltpu.get_tpu_info().vmem_capacity_bytes)
        return int(min(cap * 7 // 8, 128 * 1024 * 1024))
    except Exception:
        return 64 * 1024 * 1024


def encoder_layer(x, bias3, params, n_heads):
    """One EncoderLayer forward. x: [B,S,H] f32, bias3: [B,1,S] additive mask."""
    B, S, H = x.shape
    head_dim = H // n_heads
    pf_dim = params["w1"].shape[1]
    tq = _choose_q_tile(S)
    n_q = S // tq

    args = [params[k] for k in PACKED_PARAM_ORDER]

    def full_spec(a):
        nd = a.ndim
        # constant index_map: weights stay resident across all grid steps
        return pl.BlockSpec(a.shape, lambda b, q, _nd=nd: (0,) * _nd)

    in_specs = [
        # full sequence per batch element (resident across its query tiles)
        pl.BlockSpec((None, S, H), lambda b, q: (b, 0, 0)),
        # additive key-padding bias
        pl.BlockSpec((None, 1, S), lambda b, q: (b, 0, 0)),
    ] + [full_spec(a) for a in args]

    kernel = functools.partial(encoder_layer_kernel, n_heads, head_dim, tq)

    # advisory cost hint so XLA schedules the surrounding gathers around us
    flops = B * (2 * S * H * 3 * H            # fused QKV (once per batch elt)
                 + 2 * 2 * S * S * H          # QK^T + attn@V (all heads)
                 + 2 * S * H * H              # wo
                 + 2 * 2 * S * H * pf_dim)    # FFN
    transcendentals = B * (n_heads * S * S + n_heads * S + 2 * S)
    bytes_accessed = (2 * x.size * 4 + bias3.size * 4
                      + sum(int(a.size) * a.dtype.itemsize for a in args))
    cost = (pl.CostEstimate(flops=flops, transcendentals=transcendentals,
                            bytes_accessed=bytes_accessed)
            if hasattr(pl, "CostEstimate") else None)

    return pl.pallas_call(
        kernel,
        out_shape=jax.ShapeDtypeStruct((B, S, H), jnp.float32),
        grid_spec=pltpu.PrefetchScalarGridSpec(
            num_scalar_prefetch=0,
            # q-tile axis must stay "arbitrary": the QKV scratch is filled at
            # qi==0 and reused across the tiles of the same batch element.
            grid=(B, n_q),
            in_specs=in_specs,
            out_specs=pl.BlockSpec((None, tq, H), lambda b, q: (b, q, 0)),
            scratch_shapes=[pltpu.VMEM((n_heads, S, head_dim), jnp.bfloat16)] * 3,
        ),
        compiler_params=_CompilerParams(
            dimension_semantics=("parallel", "arbitrary"),
            vmem_limit_bytes=_vmem_limit_bytes()),
        cost_estimate=cost,
    )(x, bias3, *args)


def init_layer_params(key, H, pf_dim):
    """Torch-style f32 parameters (used directly by the pure-JAX reference)."""
    ks = jax.random.split(key, 6)

    def lin(k, din, dout):
        kw, kb = jax.random.split(k)
        bound = 1.0 / math.sqrt(din)
        w = jax.random.uniform(kw, (din, dout), jnp.float32, -bound, bound)
        b = jax.random.uniform(kb, (1, dout), jnp.float32, -bound, bound)
        return w, b

    wq, bq = lin(ks[0], H, H)
    wk, bk = lin(ks[1], H, H)
    wv, bv = lin(ks[2], H, H)
    wo, bo = lin(ks[3], H, H)
    w1, bf1 = lin(ks[4], H, pf_dim)
    w2, bf2 = lin(ks[5], pf_dim, H)
    # TODO(synk): MultiHeadAttentionLayer also defines v/W/U linears, but they
    # are unused on the 'gen' attention path, so they are not materialized.
    return dict(
        wq=wq, bq=bq, wk=wk, bk=bk, wv=wv, bv=bv, wo=wo, bo=bo,
        g1=jnp.ones((1, H), jnp.float32), bn1=jnp.zeros((1, H), jnp.float32),
        w1=w1, bf1=bf1, w2=w2, bf2=bf2,
        g2=jnp.ones((1, H), jnp.float32), bn2=jnp.zeros((1, H), jnp.float32),
    )


def pack_layer_params(p):
    """One-time packing for the kernel: fused bf16 QKV weight, bf16 MXU mats."""
    bf16 = jnp.bfloat16
    return dict(
        wqkv=jnp.concatenate([p["wq"], p["wk"], p["wv"]], axis=1).astype(bf16),
        bqkv=jnp.concatenate([p["bq"], p["bk"], p["bv"]], axis=1),
        wo=p["wo"].astype(bf16), bo=p["bo"],
        g1=p["g1"], bn1=p["bn1"],
        w1=p["w1"].astype(bf16), bf1=p["bf1"],
        w2=p["w2"].astype(bf16), bf2=p["bf2"],
        g2=p["g2"], bn2=p["bn2"],
    )


def encoder_forward(src, src_mask, tok_emb, pos_emb, packed_layer_params, n_heads):
    """Encoder.forward (Pallas). src: [B,S] int32, src_mask: [B,S] {0,1} float."""
    B, S = src.shape
    H = tok_emb.shape[1]
    # dropout == identity (eval mode); embedding gathers are plain-JAX glue
    x = tok_emb[src] * math.sqrt(H) + pos_emb[jnp.arange(S)][None, :, :]
    # additive mask bias computed ONCE, shared by every layer
    bias3 = jnp.where(src_mask.reshape(B, 1, S) == 0, -1e10, 0.0).astype(jnp.float32)
    for p in packed_layer_params:
        x = encoder_layer(x, bias3, p, n_heads)
    return x


def encoder_forward_ref(src, src_mask, tok_emb, pos_emb, layer_params, n_heads):
    """Pure-JAX f32 reference matching the PyTorch module (eval mode)."""
    B, S = src.shape
    H = tok_emb.shape[1]
    d = H // n_heads
    x = tok_emb[src] * math.sqrt(H) + pos_emb[jnp.arange(S)][None, :, :]
    mask = src_mask.reshape(B, 1, 1, S)
    for p in layer_params:
        q = x @ p["wq"] + p["bq"]
        k = x @ p["wk"] + p["bk"]
        v = x @ p["wv"] + p["bv"]
        sp = lambda t: t.reshape(B, S, n_heads, d).transpose(0, 2, 1, 3)
        qh, kh, vh = sp(q), sp(k), sp(v)
        energy = jnp.einsum('bnqd,bnkd->bnqk', qh, kh) / math.sqrt(d)
        energy = jnp.where(mask == 0, -1e10, energy)
        attn = jax.nn.softmax(energy, axis=-1)
        ctx = jnp.einsum('bnqk,bnkd->bnqd', attn, vh)
        ctx = ctx.transpose(0, 2, 1, 3).reshape(B, S, H)
        a_out = ctx @ p["wo"] + p["bo"]
        y = _layer_norm(x + a_out, p["g1"], p["bn1"])
        ff = jnp.maximum(y @ p["w1"] + p["bf1"], 0.0) @ p["w2"] + p["bf2"]
        x = _layer_norm(y + ff, p["g2"], p["bn2"])
    return x


if __name__ == "__main__":
    B, S, H = 2, 8, 32
    n_heads, pf_dim, n_layers = 4, 64, 2
    vocab, max_len, pad_idx = 50, 100, 0

    key = jax.random.PRNGKey(0)
    kt, kp, kl, ks = jax.random.split(key, 4)

    tok_emb = jax.random.normal(kt, (vocab, H), jnp.float32) * 0.02
    pos_emb = jax.random.normal(kp, (max_len, H), jnp.float32) * 0.02
    raw_params = [init_layer_params(k, H, pf_dim)
                  for k in jax.random.split(kl, n_layers)]
    packed_params = [pack_layer_params(p) for p in raw_params]

    src = jax.random.randint(ks, (B, S), 1, vocab).astype(jnp.int32)
    src = src.at[1, 6:].set(pad_idx)            # a couple of padding tokens
    src_mask = (src != pad_idx).astype(jnp.float32)

    out = encoder_forward(src, src_mask, tok_emb, pos_emb, packed_params, n_heads)
    out = jax.block_until_ready(out)

    ref = encoder_forward_ref(src, src_mask, tok_emb, pos_emb, raw_params, n_heads)

    assert out.shape == (B, S, H)
    assert bool(jnp.all(jnp.isfinite(out)))
    # bf16 MXU + approx reciprocal vs pure f32 reference: loose tolerance.
    assert bool(jnp.allclose(out, ref, atol=5e-2, rtol=5e-2))
    print("KERNEL_OK")
</pallas_src>

<mosaic_0001>
module attributes {stable_mosaic.version = 11 : i64} {
  func.func @encoder_layer_kernel(%arg0: i32, %arg1: i32, %arg2: memref<1x8x32xf32, #tpu.memory_space<vmem>>, %arg3: memref<1x1x8xf32, #tpu.memory_space<vmem>>, %arg4: memref<32x96xbf16, #tpu.memory_space<vmem>>, %arg5: memref<1x96xf32, #tpu.memory_space<vmem>>, %arg6: memref<32x32xbf16, #tpu.memory_space<vmem>>, %arg7: memref<1x32xf32, #tpu.memory_space<vmem>>, %arg8: memref<1x32xf32, #tpu.memory_space<vmem>>, %arg9: memref<1x32xf32, #tpu.memory_space<vmem>>, %arg10: memref<32x64xbf16, #tpu.memory_space<vmem>>, %arg11: memref<1x64xf32, #tpu.memory_space<vmem>>, %arg12: memref<64x32xbf16, #tpu.memory_space<vmem>>, %arg13: memref<1x32xf32, #tpu.memory_space<vmem>>, %arg14: memref<1x32xf32, #tpu.memory_space<vmem>>, %arg15: memref<1x32xf32, #tpu.memory_space<vmem>>, %arg16: memref<1x8x32xf32, #tpu.memory_space<vmem>>, %arg17: memref<4x8x8xbf16, #tpu.memory_space<vmem>>, %arg18: memref<4x8x8xbf16, #tpu.memory_space<vmem>>, %arg19: memref<4x8x8xbf16, #tpu.memory_space<vmem>>) attributes {dimension_semantics = [#tpu.dimension_semantics<parallel>, #tpu.dimension_semantics<arbitrary>], iteration_bounds = array<i64: 2, 1>, scalar_prefetch = 0 : i64, scratch_operands = 3 : i64, tpu.core_type = #tpu.core_type<tc>, window_params = [{transform_indices = @transform_0, window_bounds = array<i64: 1, 8, 32>}, {transform_indices = @transform_1, window_bounds = array<i64: 1, 1, 8>}, {pipeline_mode = #tpu.pipeline_mode<synchronous>, transform_indices = @transform_2, window_bounds = array<i64: 32, 96>}, {pipeline_mode = #tpu.pipeline_mode<synchronous>, transform_indices = @transform_3, window_bounds = array<i64: 1, 96>}, {pipeline_mode = #tpu.pipeline_mode<synchronous>, transform_indices = @transform_4, window_bounds = array<i64: 32, 32>}, {pipeline_mode = #tpu.pipeline_mode<synchronous>, transform_indices = @transform_5, window_bounds = array<i64: 1, 32>}, {pipeline_mode = #tpu.pipeline_mode<synchronous>, transform_indices = @transform_6, window_bounds = array<i64: 1, 32>}, {pipeline_mode = #tpu.pipeline_mode<synchronous>, transform_indices = @transform_7, window_bounds = array<i64: 1, 32>}, {pipeline_mode = #tpu.pipeline_mode<synchronous>, transform_indices = @transform_8, window_bounds = array<i64: 32, 64>}, {pipeline_mode = #tpu.pipeline_mode<synchronous>, transform_indices = @transform_9, window_bounds = array<i64: 1, 64>}, {pipeline_mode = #tpu.pipeline_mode<synchronous>, transform_indices = @transform_10, window_bounds = array<i64: 64, 32>}, {pipeline_mode = #tpu.pipeline_mode<synchronous>, transform_indices = @transform_11, window_bounds = array<i64: 1, 32>}, {pipeline_mode = #tpu.pipeline_mode<synchronous>, transform_indices = @transform_12, window_bounds = array<i64: 1, 32>}, {pipeline_mode = #tpu.pipeline_mode<synchronous>, transform_indices = @transform_13, window_bounds = array<i64: 1, 32>}, {transform_indices = @transform_14, window_bounds = array<i64: 1, 8, 32>}]} {
    %c0_i32 = arith.constant 0 : i32
    %0 = arith.cmpi eq, %arg1, %c0_i32 : i32
    %1 = arith.extui %0 : i1 to i32
    %c0_i32_0 = arith.constant 0 : i32
    %2 = arith.cmpi ne, %1, %c0_i32_0 : i32
    scf.if %2 {
      %c0_53 = arith.constant 0 : index
      %c0_54 = arith.constant 0 : index
      %c0_55 = arith.constant 0 : index
      %105 = vector.load %arg2[%c0_53, %c0_54, %c0_55] : memref<1x8x32xf32, #tpu.memory_space<vmem>>, vector<1x8x32xf32>
      %106 = vector.shape_cast %105 : vector<1x8x32xf32> to vector<8x32xf32>
      %107 = arith.truncf %106 : vector<8x32xf32> to vector<8x32xbf16>
      %c0_56 = arith.constant 0 : index
      %c0_57 = arith.constant 0 : index
      %108 = vector.load %arg4[%c0_56, %c0_57] : memref<32x96xbf16, #tpu.memory_space<vmem>>, vector<32x96xbf16>
      %cst_58 = arith.constant dense<0.000000e+00> : vector<8x96xf32>
      %109 = tpu.matmul %107, %108, %cst_58 {dimension_numbers = #tpu.dot_dimension_numbers<[1], [0], [0], [1], [0, 0, 1, 1], [], []>} : vector<8x32xbf16>, vector<32x96xbf16>, vector<8x96xf32> -> vector<8x96xf32>
      %c0_59 = arith.constant 0 : index
      %c0_60 = arith.constant 0 : index
      %110 = vector.load %arg5[%c0_59, %c0_60] : memref<1x96xf32, #tpu.memory_space<vmem>>, vector<1x96xf32>
      %111 = vector.broadcast %110 : vector<1x96xf32> to vector<8x96xf32>
      %112 = arith.addf %109, %111 : vector<8x96xf32>
      %113 = vector.extract_strided_slice %112 {offsets = [0, 0], sizes = [8, 32], strides = [1, 1]} : vector<8x96xf32> to vector<8x32xf32>
      %cst_61 = arith.constant 0.353553385 : f32
      %114 = vector.broadcast %cst_61 : f32 to vector<8x32xf32>
      %115 = arith.mulf %113, %114 : vector<8x32xf32>
      %116 = vector.extract_strided_slice %112 {offsets = [0, 32], sizes = [8, 32], strides = [1, 1]} : vector<8x96xf32> to vector<8x32xf32>
      %117 = vector.extract_strided_slice %112 {offsets = [0, 64], sizes = [8, 32], strides = [1, 1]} : vector<8x96xf32> to vector<8x32xf32>
      %118 = vector.shape_cast %115 : vector<8x32xf32> to vector<8x4x8xf32>
      %119 = tpu.transpose %118, [1, 0, 2] : vector<8x4x8xf32> -> vector<4x8x8xf32>
      %120 = arith.truncf %119 : vector<4x8x8xf32> to vector<4x8x8xbf16>
      %c0_62 = arith.constant 0 : index
      %c0_63 = arith.constant 0 : index
      %c0_64 = arith.constant 0 : index
      %121 = vector.load %arg17[%c0_62, %c0_63, %c0_64] : memref<4x8x8xbf16, #tpu.memory_space<vmem>>, vector<4x8x8xbf16>
      tpu.vector_store %arg17[%c0_62, %c0_63, %c0_64], %120 {strides = array<i32>} : memref<4x8x8xbf16, #tpu.memory_space<vmem>>, vector<4x8x8xbf16>,
      %122 = vector.shape_cast %116 : vector<8x32xf32> to vector<8x4x8xf32>
      %123 = tpu.transpose %122, [1, 0, 2] : vector<8x4x8xf32> -> vector<4x8x8xf32>
      %124 = arith.truncf %123 : vector<4x8x8xf32> to vector<4x8x8xbf16>
      %c0_65 = arith.constant 0 : index
      %c0_66 = arith.constant 0 : index
      %c0_67 = arith.constant 0 : index
      %125 = vector.load %arg18[%c0_65, %c0_66, %c0_67] : memref<4x8x8xbf16, #tpu.memory_space<vmem>>, vector<4x8x8xbf16>
      tpu.vector_store %arg18[%c0_65, %c0_66, %c0_67], %124 {strides = array<i32>} : memref<4x8x8xbf16, #tpu.memory_space<vmem>>, vector<4x8x8xbf16>,
      %126 = vector.shape_cast %117 : vector<8x32xf32> to vector<8x4x8xf32>
      %127 = tpu.transpose %126, [1, 0, 2] : vector<8x4x8xf32> -> vector<4x8x8xf32>
      %128 = arith.truncf %127 : vector<4x8x8xf32> to vector<4x8x8xbf16>
      %c0_68 = arith.constant 0 : index
      %c0_69 = arith.constant 0 : index
      %c0_70 = arith.constant 0 : index
      %129 = vector.load %arg19[%c0_68, %c0_69, %c0_70] : memref<4x8x8xbf16, #tpu.memory_space<vmem>>, vector<4x8x8xbf16>
      tpu.vector_store %arg19[%c0_68, %c0_69, %c0_70], %128 {strides = array<i32>} : memref<4x8x8xbf16, #tpu.memory_space<vmem>>, vector<4x8x8xbf16>,
    } else {
    }
    %c8_i32 = arith.constant 8 : i32
    %3 = arith.muli %arg1, %c8_i32 : i32
    %4 = tpu.assume_multiple %3, 8 : i32
    %c0 = arith.constant 0 : index
    %5 = arith.index_cast %4 : i32 to index
    %c0_1 = arith.constant 0 : index
    %6 = vector.load %arg2[%c0, %5, %c0_1] : memref<1x8x32xf32, #tpu.memory_space<vmem>>, vector<1x8x32xf32>
    %7 = vector.shape_cast %6 : vector<1x8x32xf32> to vector<8x32xf32>
    %c0_2 = arith.constant 0 : index
    %8 = arith.index_cast %4 : i32 to index
    %c0_3 = arith.constant 0 : index
    %9 = vector.load %arg17[%c0_2, %8, %c0_3] : memref<4x8x8xbf16, #tpu.memory_space<vmem>>, vector<4x8x8xbf16>
    %c0_4 = arith.constant 0 : index
    %c0_5 = arith.constant 0 : index
    %c0_6 = arith.constant 0 : index
    %10 = vector.load %arg3[%c0_4, %c0_5, %c0_6] : memref<1x1x8xf32, #tpu.memory_space<vmem>>, vector<1x1x8xf32>
    %11 = vector.shape_cast %10 : vector<1x1x8xf32> to vector<1x8xf32>
    %c0_7 = arith.constant 0 : index
    %c0_8 = arith.constant 0 : index
    %c0_9 = arith.constant 0 : index
    %12 = vector.load %arg18[%c0_7, %c0_8, %c0_9] : memref<4x8x8xbf16, #tpu.memory_space<vmem>>, vector<4x8x8xbf16>
    "tpu.trace_start"() <{level = 10 : i32, message = "nqd,nkd->nqk"}> : () -> ()
    %cst = arith.constant dense<0.000000e+00> : vector<4x8x8xf32>
    %13 = tpu.matmul %9, %12, %cst {dimension_numbers = #tpu.dot_dimension_numbers<[2], [2], [1], [1], [0, 0, 0, 1, 1, 1], [0], [0]>} : vector<4x8x8xbf16>, vector<4x8x8xbf16>, vector<4x8x8xf32> -> vector<4x8x8xf32>
    "tpu.trace_stop"() : () -> ()
    %14 = vector.shape_cast %11 : vector<1x8xf32> to vector<1x1x8xf32>
    %15 = vector.broadcast %14 : vector<1x1x8xf32> to vector<4x8x8xf32>
    %16 = arith.addf %13, %15 : vector<4x8x8xf32>
    %cst_10 = arith.constant dense<0xFF800000> : vector<4x8xf32>
    %17 = vector.multi_reduction <maximumf>, %16, %cst_10 [2] : vector<4x8x8xf32> to vector<4x8xf32>
    %18 = vector.shape_cast %17 : vector<4x8xf32> to vector<4x8x1xf32>
    %19 = vector.broadcast %18 : vector<4x8x1xf32> to vector<4x8x8xf32>
    %20 = arith.subf %16, %19 : vector<4x8x8xf32>
    %21 = math.exp %20 : vector<4x8x8xf32>
    %cst_11 = arith.constant dense<0.000000e+00> : vector<4x8xf32>
    %22 = vector.multi_reduction <add>, %21, %cst_11 [2] : vector<4x8x8xf32> to vector<4x8xf32>
    %23 = vector.shape_cast %22 : vector<4x8xf32> to vector<4x8x1xf32>
    %24 = tpu.reciprocal %23 {approx = true} : vector<4x8x1xf32> -> vector<4x8x1xf32>
    %25 = vector.broadcast %24 : vector<4x8x1xf32> to vector<4x8x8xf32>
    %26 = arith.mulf %21, %25 : vector<4x8x8xf32>
    %27 = arith.truncf %26 : vector<4x8x8xf32> to vector<4x8x8xbf16>
    %c0_12 = arith.constant 0 : index
    %c0_13 = arith.constant 0 : index
    %c0_14 = arith.constant 0 : index
    %28 = vector.load %arg19[%c0_12, %c0_13, %c0_14] : memref<4x8x8xbf16, #tpu.memory_space<vmem>>, vector<4x8x8xbf16>
    "tpu.trace_start"() <{level = 10 : i32, message = "nqk,nkd->nqd"}> : () -> ()
    %cst_15 = arith.constant dense<0.000000e+00> : vector<4x8x8xf32>
    %29 = tpu.matmul %27, %28, %cst_15 {dimension_numbers = #tpu.dot_dimension_numbers<[2], [1], [1], [2], [0, 0, 0, 1, 1, 2], [0], [0]>} : vector<4x8x8xbf16>, vector<4x8x8xbf16>, vector<4x8x8xf32> -> vector<4x8x8xf32>
    "tpu.trace_stop"() : () -> ()
    %30 = tpu.transpose %29, [1, 0, 2] : vector<4x8x8xf32> -> vector<8x4x8xf32>
    %31 = vector.shape_cast %30 : vector<8x4x8xf32> to vector<8x32xf32>
    %32 = arith.truncf %31 : vector<8x32xf32> to vector<8x32xbf16>
    %c0_16 = arith.constant 0 : index
    %c0_17 = arith.constant 0 : index
    %33 = vector.load %arg6[%c0_16, %c0_17] : memref<32x32xbf16, #tpu.memory_space<vmem>>, vector<32x32xbf16>
    %cst_18 = arith.constant dense<0.000000e+00> : vector<8x32xf32>
    %34 = tpu.matmul %32, %33, %cst_18 {dimension_numbers = #tpu.dot_dimension_numbers<[1], [0], [0], [1], [0, 0, 1, 1], [], []>} : vector<8x32xbf16>, vector<32x32xbf16>, vector<8x32xf32> -> vector<8x32xf32>
    %c0_19 = arith.constant 0 : index
    %c0_20 = arith.constant 0 : index
    %35 = vector.load %arg7[%c0_19, %c0_20] : memref<1x32xf32, #tpu.memory_space<vmem>>, vector<1x32xf32>
    %36 = vector.broadcast %35 : vector<1x32xf32> to vector<8x32xf32>
    %37 = arith.addf %34, %36 : vector<8x32xf32>
    %38 = arith.addf %7, %37 : vector<8x32xf32>
    %c0_21 = arith.constant 0 : index
    %c0_22 = arith.constant 0 : index
    %39 = vector.load %arg8[%c0_21, %c0_22] : memref<1x32xf32, #tpu.memory_space<vmem>>, vector<1x32xf32>
    %c0_23 = arith.constant 0 : index
    %c0_24 = arith.constant 0 : index
    %40 = vector.load %arg9[%c0_23, %c0_24] : memref<1x32xf32, #tpu.memory_space<vmem>>, vector<1x32xf32>
    %cst_25 = arith.constant dense<0.000000e+00> : vector<8xf32>
    %41 = vector.multi_reduction <add>, %38, %cst_25 [1] : vector<8x32xf32> to vector<8xf32>
    %42 = vector.shape_cast %41 : vector<8xf32> to vector<8x1xf32>
    %cst_26 = arith.constant 3.200000e+01 : f32
    %43 = vector.broadcast %cst_26 : f32 to vector<8x1xf32>
    %44 = arith.divf %42, %43 : vector<8x1xf32>
    %45 = vector.broadcast %44 : vector<8x1xf32> to vector<8x32xf32>
    %46 = arith.subf %38, %45 : vector<8x32xf32>
    %47 = arith.mulf %46, %46 : vector<8x32xf32>
    %cst_27 = arith.constant dense<0.000000e+00> : vector<8xf32>
    %48 = vector.multi_reduction <add>, %47, %cst_27 [1] : vector<8x32xf32> to vector<8xf32>
    %49 = vector.shape_cast %48 : vector<8xf32> to vector<8x1xf32>
    %cst_28 = arith.constant 3.200000e+01 : f32
    %50 = vector.broadcast %cst_28 : f32 to vector<8x1xf32>
    %51 = arith.divf %49, %50 : vector<8x1xf32>
    %52 = vector.broadcast %44 : vector<8x1xf32> to vector<8x32xf32>
    %53 = arith.subf %38, %52 : vector<8x32xf32>
    %cst_29 = arith.constant 9.99999974E-6 : f32
    %54 = vector.broadcast %cst_29 : f32 to vector<8x1xf32>
    %55 = arith.addf %51, %54 : vector<8x1xf32>
    %56 = math.rsqrt %55 : vector<8x1xf32>
    %57 = vector.broadcast %56 : vector<8x1xf32> to vector<8x32xf32>
    %58 = arith.mulf %53, %57 : vector<8x32xf32>
    %59 = vector.broadcast %39 : vector<1x32xf32> to vector<8x32xf32>
    %60 = arith.mulf %58, %59 : vector<8x32xf32>
    %61 = vector.broadcast %40 : vector<1x32xf32> to vector<8x32xf32>
    %62 = arith.addf %60, %61 : vector<8x32xf32>
    %63 = arith.truncf %62 : vector<8x32xf32> to vector<8x32xbf16>
    %c0_30 = arith.constant 0 : index
    %c0_31 = arith.constant 0 : index
    %64 = vector.load %arg10[%c0_30, %c0_31] : memref<32x64xbf16, #tpu.memory_space<vmem>>, vector<32x64xbf16>
    %cst_32 = arith.constant dense<0.000000e+00> : vector<8x64xf32>
    %65 = tpu.matmul %63, %64, %cst_32 {dimension_numbers = #tpu.dot_dimension_numbers<[1], [0], [0], [1], [0, 0, 1, 1], [], []>} : vector<8x32xbf16>, vector<32x64xbf16>, vector<8x64xf32> -> vector<8x64xf32>
    %c0_33 = arith.constant 0 : index
    %c0_34 = arith.constant 0 : index
    %66 = vector.load %arg11[%c0_33, %c0_34] : memref<1x64xf32, #tpu.memory_space<vmem>>, vector<1x64xf32>
    %67 = vector.broadcast %66 : vector<1x64xf32> to vector<8x64xf32>
    %68 = arith.addf %65, %67 : vector<8x64xf32>
    %cst_35 = arith.constant 0.000000e+00 : f32
    %69 = vector.broadcast %cst_35 : f32 to vector<8x64xf32>
    %70 = arith.maximumf %68, %69 : vector<8x64xf32>
    %71 = arith.truncf %70 : vector<8x64xf32> to vector<8x64xbf16>
    %c0_36 = arith.constant 0 : index
    %c0_37 = arith.constant 0 : index
    %72 = vector.load %arg12[%c0_36, %c0_37] : memref<64x32xbf16, #tpu.memory_space<vmem>>, vector<64x32xbf16>
    %cst_38 = arith.constant dense<0.000000e+00> : vector<8x32xf32>
    %73 = tpu.matmul %71, %72, %cst_38 {dimension_numbers = #tpu.dot_dimension_numbers<[1], [0], [0], [1], [0, 0, 1, 1], [], []>} : vector<8x64xbf16>, vector<64x32xbf16>, vector<8x32xf32> -> vector<8x32xf32>
    %c0_39 = arith.constant 0 : index
    %c0_40 = arith.constant 0 : index
    %74 = vector.load %arg13[%c0_39, %c0_40] : memref<1x32xf32, #tpu.memory_space<vmem>>, vector<1x32xf32>
    %75 = vector.broadcast %74 : vector<1x32xf32> to vector<8x32xf32>
    %76 = arith.addf %73, %75 : vector<8x32xf32>
    %77 = arith.addf %62, %76 : vector<8x32xf32>
    %c0_41 = arith.constant 0 : index
    %c0_42 = arith.constant 0 : index
    %78 = vector.load %arg14[%c0_41, %c0_42] : memref<1x32xf32, #tpu.memory_space<vmem>>, vector<1x32xf32>
    %c0_43 = arith.constant 0 : index
    %c0_44 = arith.constant 0 : index
    %79 = vector.load %arg15[%c0_43, %c0_44] : memref<1x32xf32, #tpu.memory_space<vmem>>, vector<1x32xf32>
    %cst_45 = arith.constant dense<0.000000e+00> : vector<8xf32>
    %80 = vector.multi_reduction <add>, %77, %cst_45 [1] : vector<8x32xf32> to vector<8xf32>
    %81 = vector.shape_cast %80 : vector<8xf32> to vector<8x1xf32>
    %cst_46 = arith.constant 3.200000e+01 : f32
    %82 = vector.broadcast %cst_46 : f32 to vector<8x1xf32>
    %83 = arith.divf %81, %82 : vector<8x1xf32>
    %84 = vector.broadcast %83 : vector<8x1xf32> to vector<8x32xf32>
    %85 = arith.subf %77, %84 : vector<8x32xf32>
    %86 = arith.mulf %85, %85 : vector<8x32xf32>
    %cst_47 = arith.constant dense<0.000000e+00> : vector<8xf32>
    %87 = vector.multi_reduction <add>, %86, %cst_47 [1] : vector<8x32xf32> to vector<8xf32>
    %88 = vector.shape_cast %87 : vector<8xf32> to vector<8x1xf32>
    %cst_48 = arith.constant 3.200000e+01 : f32
    %89 = vector.broadcast %cst_48 : f32 to vector<8x1xf32>
    %90 = arith.divf %88, %89 : vector<8x1xf32>
    %91 = vector.broadcast %83 : vector<8x1xf32> to vector<8x32xf32>
    %92 = arith.subf %77, %91 : vector<8x32xf32>
    %cst_49 = arith.constant 9.99999974E-6 : f32
    %93 = vector.broadcast %cst_49 : f32 to vector<8x1xf32>
    %94 = arith.addf %90, %93 : vector<8x1xf32>
    %95 = math.rsqrt %94 : vector<8x1xf32>
    %96 = vector.broadcast %95 : vector<8x1xf32> to vector<8x32xf32>
    %97 = arith.mulf %92, %96 : vector<8x32xf32>
    %98 = vector.broadcast %78 : vector<1x32xf32> to vector<8x32xf32>
    %99 = arith.mulf %97, %98 : vector<8x32xf32>
    %100 = vector.broadcast %79 : vector<1x32xf32> to vector<8x32xf32>
    %101 = arith.addf %99, %100 : vector<8x32xf32>
    %c0_50 = arith.constant 0 : index
    %c0_51 = arith.constant 0 : index
    %c0_52 = arith.constant 0 : index
    %102 = vector.load %arg16[%c0_50, %c0_51, %c0_52] : memref<1x8x32xf32, #tpu.memory_space<vmem>>, vector<1x8x32xf32>
    %103 = vector.shape_cast %102 : vector<1x8x32xf32> to vector<8x32xf32>
    %104 = vector.shape_cast %101 : vector<8x32xf32> to vector<1x8x32xf32>
    tpu.vector_store %arg16[%c0_50, %c0_51, %c0_52], %104 {strides = array<i32>} : memref<1x8x32xf32, #tpu.memory_space<vmem>>, vector<1x8x32xf32>,
    return
  }
  func.func @transform_0(%arg0: i32, %arg1: i32) -> (i32, i32, i32) {
    %c0_i32 = arith.constant 0 : i32
    %c0_i32_0 = arith.constant 0 : i32
    %c0_i32_1 = arith.constant 0 : i32
    return %arg0, %c0_i32, %c0_i32_0 : i32, i32, i32
  }
  func.func @transform_1(%arg0: i32, %arg1: i32) -> (i32, i32, i32) {
    %c0_i32 = arith.constant 0 : i32
    %c0_i32_0 = arith.constant 0 : i32
    %c0_i32_1 = arith.constant 0 : i32
    return %arg0, %c0_i32, %c0_i32_0 : i32, i32, i32
  }
  func.func @transform_2(%arg0: i32, %arg1: i32) -> (i32, i32) {
    %c0_i32 = arith.constant 0 : i32
    %c0_i32_0 = arith.constant 0 : i32
    %c0_i32_1 = arith.constant 0 : i32
    return %c0_i32, %c0_i32_0 : i32, i32
  }
  func.func @transform_3(%arg0: i32, %arg1: i32) -> (i32, i32) {
    %c0_i32 = arith.constant 0 : i32
    %c0_i32_0 = arith.constant 0 : i32
    %c0_i32_1 = arith.constant 0 : i32
    return %c0_i32, %c0_i32_0 : i32, i32
  }
  func.func @transform_4(%arg0: i32, %arg1: i32) -> (i32, i32) {
    %c0_i32 = arith.constant 0 : i32
    %c0_i32_0 = arith.constant 0 : i32
    %c0_i32_1 = arith.constant 0 : i32
    return %c0_i32, %c0_i32_0 : i32, i32
  }
  func.func @transform_5(%arg0: i32, %arg1: i32) -> (i32, i32) {
    %c0_i32 = arith.constant 0 : i32
    %c0_i32_0 = arith.constant 0 : i32
    %c0_i32_1 = arith.constant 0 : i32
    return %c0_i32, %c0_i32_0 : i32, i32
  }
  func.func @transform_6(%arg0: i32, %arg1: i32) -> (i32, i32) {
    %c0_i32 = arith.constant 0 : i32
    %c0_i32_0 = arith.constant 0 : i32
    %c0_i32_1 = arith.constant 0 : i32
    return %c0_i32, %c0_i32_0 : i32, i32
  }
  func.func @transform_7(%arg0: i32, %arg1: i32) -> (i32, i32) {
    %c0_i32 = arith.constant 0 : i32
    %c0_i32_0 = arith.constant 0 : i32
    %c0_i32_1 = arith.constant 0 : i32
    return %c0_i32, %c0_i32_0 : i32, i32
  }
  func.func @transform_8(%arg0: i32, %arg1: i32) -> (i32, i32) {
    %c0_i32 = arith.constant 0 : i32
    %c0_i32_0 = arith.constant 0 : i32
    %c0_i32_1 = arith.constant 0 : i32
    return %c0_i32, %c0_i32_0 : i32, i32
  }
  func.func @transform_9(%arg0: i32, %arg1: i32) -> (i32, i32) {
    %c0_i32 = arith.constant 0 : i32
    %c0_i32_0 = arith.constant 0 : i32
    %c0_i32_1 = arith.constant 0 : i32
    return %c0_i32, %c0_i32_0 : i32, i32
  }
  func.func @transform_10(%arg0: i32, %arg1: i32) -> (i32, i32) {
    %c0_i32 = arith.constant 0 : i32
    %c0_i32_0 = arith.constant 0 : i32
    %c0_i32_1 = arith.constant 0 : i32
    return %c0_i32, %c0_i32_0 : i32, i32
  }
  func.func @transform_11(%arg0: i32, %arg1: i32) -> (i32, i32) {
    %c0_i32 = arith.constant 0 : i32
    %c0_i32_0 = arith.constant 0 : i32
    %c0_i32_1 = arith.constant 0 : i32
    return %c0_i32, %c0_i32_0 : i32, i32
  }
  func.func @transform_12(%arg0: i32, %arg1: i32) -> (i32, i32) {
    %c0_i32 = arith.constant 0 : i32
    %c0_i32_0 = arith.constant 0 : i32
    %c0_i32_1 = arith.constant 0 : i32
    return %c0_i32, %c0_i32_0 : i32, i32
  }
  func.func @transform_13(%arg0: i32, %arg1: i32) -> (i32, i32) {
    %c0_i32 = arith.constant 0 : i32
    %c0_i32_0 = arith.constant 0 : i32
    %c0_i32_1 = arith.constant 0 : i32
    return %c0_i32, %c0_i32_0 : i32, i32
  }
  func.func @transform_14(%arg0: i32, %arg1: i32) -> (i32, i32, i32) {
    %c0_i32 = arith.constant 0 : i32
    %c0_i32_0 = arith.constant 0 : i32
    return %arg0, %arg1, %c0_i32 : i32, i32, i32
  }
}

</mosaic_0001>

<llo_original>
// kernel: tpu_custom_call.1
$region0: #{tpu_custom_call.1}
  #allocation0 [shape = 'u32[]', space=smem, size = 0x4, offset = 0x4, fixed_abs, tag = 'smem constant byte address 0x4 - core index']
  #allocation1 [shape = 'u32[144,128]{1,0:T(1,128)}', space=vmem, size = 0x12000, scoped, tag = 'internal scratch']
  #allocation2 [shape = 'bf16[4,8,8]{2,1,0:T(8,128)(2,1)}', space=vmem, size = 0x2000, scoped, tag = 'scratch operand']
  #allocation3 [shape = 'bf16[4,8,8]{2,1,0:T(8,128)(2,1)}', space=vmem, size = 0x2000, scoped, tag = 'scratch operand']
  #allocation4 [shape = 'bf16[4,8,8]{2,1,0:T(8,128)(2,1)}', space=vmem, size = 0x2000, scoped, tag = 'scratch operand']
  %s0 = inlined_call_operand.hbm [shape: f32[2,8,32], index: 0, kind: input, shape index: {}]
  %s1 = inlined_call_operand.hbm [shape: f32[2,1,8], index: 1, kind: input, shape index: {}]
  %s2 = inlined_call_operand.hbm [shape: bf16[32,96], index: 2, kind: input, shape index: {}]
  %s3 = inlined_call_operand.hbm [shape: f32[1,96], index: 3, kind: input, shape index: {}]
  %s4 = inlined_call_operand.hbm [shape: bf16[32,32], index: 4, kind: input, shape index: {}]
  %s5 = inlined_call_operand.hbm [shape: f32[1,32], index: 5, kind: input, shape index: {}]
  %s6 = inlined_call_operand.hbm [shape: f32[1,32], index: 6, kind: input, shape index: {}]
  %s7 = inlined_call_operand.hbm [shape: f32[1,32], index: 7, kind: input, shape index: {}]
  %s8 = inlined_call_operand.hbm [shape: bf16[32,64], index: 8, kind: input, shape index: {}]
  %s9 = inlined_call_operand.hbm [shape: f32[1,64], index: 9, kind: input, shape index: {}]
  %s10 = inlined_call_operand.hbm [shape: bf16[64,32], index: 10, kind: input, shape index: {}]
  %s11 = inlined_call_operand.hbm [shape: f32[1,32], index: 11, kind: input, shape index: {}]
  %s12 = inlined_call_operand.hbm [shape: f32[1,32], index: 12, kind: input, shape index: {}]
  %s13 = inlined_call_operand.hbm [shape: f32[1,32], index: 13, kind: input, shape index: {}]
  %s14 = inlined_call_operand.hbm [shape: f32[2,8,32], index: 14, kind: output, shape index: {}]
  %s15 = sld [smem:[#allocation0]]
  $region149: #{tpu_custom_call.1} parent=0
    _
  %s17 = ssub.s32 1, %s15
  %s18 = scalar_select 0, %s17, %s15
  $region1: #{tpu_custom_call.1} parent=0
    #allocation5 [shape = 'u8[8192]{0}', space=vmem, size = 0x2000, scoped, tag = 'input window, operand 0']
    #allocation6 [shape = 's32[2]{0}', space=sflag, size = 0x8, scoped, tag = 'scoped memory for tpu_custom_call.1']
    #allocation7 [shape = 's32[2]{0}', space=sflag, size = 0x8, scoped, tag = 'scoped memory for tpu_custom_call.1']
    #allocation8 [shape = 'u8[1024]{0}', space=vmem, size = 0x400, scoped, tag = 'input window, operand 1']
    #allocation9 [shape = 's32[2]{0}', space=sflag, size = 0x8, scoped, tag = 'scoped memory for tpu_custom_call.1']
    #allocation10 [shape = 'u8[8192]{0}', space=vmem, size = 0x2000, scoped, tag = 'input window, operand 2, single buffered']
    #allocation11 [shape = 'u8[512]{0}', space=vmem, size = 0x400, scoped, tag = 'input window, operand 3, single buffered']
    #allocation12 [shape = 's32[1]{0}', space=sflag, size = 0x4, scoped, tag = 'scoped memory for tpu_custom_call.1']
    #allocation13 [shape = 'u8[8192]{0}', space=vmem, size = 0x2000, scoped, tag = 'input window, operand 4, single buffered']
    #allocation14 [shape = 'u8[512]{0}', space=vmem, size = 0x400, scoped, tag = 'input window, operand 5, single buffered']
    #allocation15 [shape = 's32[1]{0}', space=sflag, size = 0x4, scoped, tag = 'scoped memory for tpu_custom_call.1']
    #allocation16 [shape = 'u8[512]{0}', space=vmem, size = 0x400, scoped, tag = 'input window, operand 6, single buffered']
    #allocation17 [shape = 'u8[512]{0}', space=vmem, size = 0x400, scoped, tag = 'input window, operand 7, single buffered']
    #allocation18 [shape = 's32[1]{0}', space=sflag, size = 0x4, scoped, tag = 'scoped memory for tpu_custom_call.1']
    #allocation19 [shape = 'u8[8192]{0}', space=vmem, size = 0x2000, scoped, tag = 'input window, operand 8, single buffered']
    #allocation20 [shape = 'u8[512]{0}', space=vmem, size = 0x400, scoped, tag = 'input window, operand 9, single buffered']
    #allocation21 [shape = 's32[1]{0}', space=sflag, size = 0x4, scoped, tag = 'scoped memory for tpu_custom_call.1']
    #allocation22 [shape = 'u8[16384]{0}', space=vmem, size = 0x4000, scoped, tag = 'input window, operand 10, single buffered']
    #allocation23 [shape = 'u8[512]{0}', space=vmem, size = 0x400, scoped, tag = 'input window, operand 11, single buffered']
    #allocation24 [shape = 's32[1]{0}', space=sflag, size = 0x4, scoped, tag = 'scoped memory for tpu_custom_call.1']
    #allocation25 [shape = 'u8[512]{0}', space=vmem, size = 0x400, scoped, tag = 'input window, operand 12, single buffered']
    #allocation26 [shape = 'u8[512]{0}', space=vmem, size = 0x400, scoped, tag = 'input window, operand 13, single buffered']
    #allocation27 [shape = 's32[1]{0}', space=sflag, size = 0x4, scoped, tag = 'scoped memory for tpu_custom_call.1']
    #allocation28 [shape = 'u8[8192]{0}', space=vmem, size = 0x2000, scoped, tag = 'output window, operand 0']
    %19 = vsyncpa [#allocation6], 0
    %s20 = scalar_lea.sflag [#allocation6], 1
    %21 = vsyncpa %s20, 0
    %22 = vsyncpa [#allocation9], 0
    %s23 = scalar_lea.sflag [#allocation9], 1
    %24 = vsyncpa %s23, 0
    %25 = vsyncpa [#allocation12], 0
    %26 = vsyncpa [#allocation15], 0
    %27 = vsyncpa [#allocation18], 0
    %28 = vsyncpa [#allocation21], 0
    %29 = vsyncpa [#allocation24], 0
    %30 = vsyncpa [#allocation27], 0
    %31 = vsyncpa [#allocation7], 0
    %s32 = scalar_lea.sflag [#allocation7], 1
    %33 = vsyncpa %s32, 0
    loop: start=0, step=1, limit=4
    $region2: #{tpu_custom_call.1} parent=1 // loop_pre_header
      _
    $region3: #{tpu_custom_call.1} parent=1 // loop_header
      %s35 = sphi 0, %s39
      %p36 = scmp.ge.s32.totalorder %s35, 4
      %s42 = sphi 0, %s54
      %s43 = sphi 0, %s50
      %s44 = sphi 0, %s42
      %s45 = sphi 0, %s43
      %s46 = sphi 0, %s44
      %s47 = sphi 0, %s45
      %s57 = sphi 0, %s59
      %s60 = sphi 0, %s57
      %s61 = sphi 0, %s60
      %s77 = sphi 0, %s61
      %s83 = sphi 0, %s85
      %s86 = sphi 0, %s83
      %s87 = sphi 0, %s86
      %s103 = sphi 0, %s87
      %s107 = sphi 0, %s107
      %s109 = sphi 0, %s107
      %s110 = sphi 0, %s109
      %s124 = sphi 0, %s110
      %s128 = sphi 0, %s128
      %s130 = sphi 0, %s128
      %s131 = sphi 0, %s130
      %s145 = sphi 0, %s131
      %s149 = sphi 0, %s149
      %s151 = sphi 0, %s149
      %s152 = sphi 0, %s151
      %s166 = sphi 0, %s152
      %s170 = sphi 0, %s170
      %s172 = sphi 0, %s170
      %s173 = sphi 0, %s172
      %s187 = sphi 0, %s173
      %s191 = sphi 0, %s191
      %s193 = sphi 0, %s191
      %s194 = sphi 0, %s193
      %s208 = sphi 0, %s194
      %s212 = sphi 0, %s212
      %s214 = sphi 0, %s212
      %s215 = sphi 0, %s214
      %s229 = sphi 0, %s215
      %s233 = sphi 0, %s233
      %s235 = sphi 0, %s233
      %s236 = sphi 0, %s235
      %s250 = sphi 0, %s236
      %s254 = sphi 0, %s254
      %s256 = sphi 0, %s254
      %s257 = sphi 0, %s256
      %s271 = sphi 0, %s257
      %s275 = sphi 0, %s275
      %s277 = sphi 0, %s275
      %s278 = sphi 0, %s277
      %s292 = sphi 0, %s278
      %s296 = sphi 0, %s296
      %s298 = sphi 0, %s296
      %s299 = sphi 0, %s298
      %s313 = sphi 0, %s299
      %s317 = sphi 0, %s317
      %s319 = sphi 0, %s317
      %s320 = sphi 0, %s319
      %s334 = sphi 0, %s320
      %s338 = sphi 0, %s338
      %s340 = sphi 0, %s338
      %s341 = sphi 0, %s340
      %s355 = sphi 0, %s341
      %s363 = sphi 0, %s365
      %s366 = sphi 0, %s363
      %s367 = sphi 0, %s366
      %s383 = sphi 0, %s367
    $region4: #{tpu_custom_call.1} parent=1 // loop_header_branch
      %38 = sbr.rel (%p36) target = $region8
    $region5: #{tpu_custom_call.1} parent=1 // loop_body
      %s40 = ssub.s32 %s35, 1
      %s41 = ssub.s32 %s35, 2
      %s48 = sadd.s32 1, %s43
      %p49 = scmp.ge.s32.totalorder %s48, 1
      %s50 = scalar_select %p49, 0, %s48
      %s51 = sadd.s32 1, %s42
      %s52 = scalar_select %p49, %s51, %s42
      %p53 = scmp.ge.s32.totalorder %s52, 2
      %s54 = scalar_select %p53, 0, %s52
      %s55 = ssub.s32 %s42, %s54
      %p56 = scmp.eq.s32.totalorder %s55, 0
      %s58 = sadd.s32 %s57, 1
      %s59 = scalar_select %p56, %s57, %s58
      %p62 = pneg %p56
      %p63 = scmp.eq.s32.totalorder %s35, 1
      %p64 = por %p62, %p63
      %p65 = scmp.ne.s32.totalorder %s57, %s60
      %p66 = scmp.eq.s32.totalorder %s35, 0
      %p67 = por %p65, %p66
      %p68 = scmp.ne.s32.totalorder %s57, %s60
      %p69 = scmp.eq.s32.totalorder %s40, 1
      %p70 = por %p68, %p69
      %p71 = scmp.ne.s32.totalorder %s60, %s61
      %p72 = scmp.eq.s32.totalorder %s40, 0
      %p73 = por %p71, %p72
      %p74 = scmp.ne.s32.totalorder %s60, %s61
      %p75 = scmp.eq.s32.totalorder %s41, 1
      %p76 = por %p74, %p75
      %p78 = scmp.ne.s32.totalorder %s61, %s77
      %p79 = scmp.eq.s32.totalorder %s41, 0
      %p80 = por %p78, %p79
      %s81 = ssub.s32 %s42, %s54
      %p82 = scmp.eq.s32.totalorder %s81, 0
      %s84 = sadd.s32 %s83, 1
      %s85 = scalar_select %p82, %s83, %s84
      %p88 = pneg %p82
      %p89 = scmp.eq.s32.totalorder %s35, 1
      %p90 = por %p88, %p89
      %p91 = scmp.ne.s32.totalorder %s83, %s86
      %p92 = scmp.eq.s32.totalorder %s35, 0
      %p93 = por %p91, %p92
      %p94 = scmp.ne.s32.totalorder %s83, %s86
      %p95 = scmp.eq.s32.totalorder %s40, 1
      %p96 = por %p94, %p95
      %p97 = scmp.ne.s32.totalorder %s86, %s87
      %p98 = scmp.eq.s32.totalorder %s40, 0
      %p99 = por %p97, %p98
      %p100 = scmp.ne.s32.totalorder %s86, %s87
      %p101 = scmp.eq.s32.totalorder %s41, 1
      %p102 = por %p100, %p101
      %p104 = scmp.ne.s32.totalorder %s87, %s103
      %p105 = scmp.eq.s32.totalorder %s41, 0
      %p106 = por %p104, %p105
      %s108 = sadd.s32 %s107, 1
      %p111 = scmp.eq.s32.totalorder %s35, 1
      %p112 = scmp.ne.s32.totalorder %s107, %s109
      %p113 = scmp.eq.s32.totalorder %s35, 0
      %p114 = por %p112, %p113
      %p115 = scmp.ne.s32.totalorder %s107, %s109
      %p116 = scmp.eq.s32.totalorder %s40, 1
      %p117 = por %p115, %p116
      %p118 = scmp.ne.s32.totalorder %s109, %s110
      %p119 = scmp.eq.s32.totalorder %s40, 0
      %p120 = por %p118, %p119
      %p121 = scmp.ne.s32.totalorder %s109, %s110
      %p122 = scmp.eq.s32.totalorder %s41, 1
      %p123 = por %p121, %p122
      %p125 = scmp.ne.s32.totalorder %s110, %s124
      %p126 = scmp.eq.s32.totalorder %s41, 0
      %p127 = por %p125, %p126
      %s129 = sadd.s32 %s128, 1
      %p132 = scmp.eq.s32.totalorder %s35, 1
      %p133 = scmp.ne.s32.totalorder %s128, %s130
      %p134 = scmp.eq.s32.totalorder %s35, 0
      %p135 = por %p133, %p134
      %p136 = scmp.ne.s32.totalorder %s128, %s130
      %p137 = scmp.eq.s32.totalorder %s40, 1
      %p138 = por %p136, %p137
      %p139 = scmp.ne.s32.totalorder %s130, %s131
      %p140 = scmp.eq.s32.totalorder %s40, 0
      %p141 = por %p139, %p140
      %p142 = scmp.ne.s32.totalorder %s130, %s131
      %p143 = scmp.eq.s32.totalorder %s41, 1
      %p144 = por %p142, %p143
      %p146 = scmp.ne.s32.totalorder %s131, %s145
      %p147 = scmp.eq.s32.totalorder %s41, 0
      %p148 = por %p146, %p147
      %s150 = sadd.s32 %s149, 1
      %p153 = scmp.eq.s32.totalorder %s35, 1
      %p154 = scmp.ne.s32.totalorder %s149, %s151
      %p155 = scmp.eq.s32.totalorder %s35, 0
      %p156 = por %p154, %p155
      %p157 = scmp.ne.s32.totalorder %s149, %s151
      %p158 = scmp.eq.s32.totalorder %s40, 1
      %p159 = por %p157, %p158
      %p160 = scmp.ne.s32.totalorder %s151, %s152
      %p161 = scmp.eq.s32.totalorder %s40, 0
      %p162 = por %p160, %p161
      %p163 = scmp.ne.s32.totalorder %s151, %s152
      %p164 = scmp.eq.s32.totalorder %s41, 1
      %p165 = por %p163, %p164
      %p167 = scmp.ne.s32.totalorder %s152, %s166
      %p168 = scmp.eq.s32.totalorder %s41, 0
      %p169 = por %p167, %p168
      %s171 = sadd.s32 %s170, 1
      %p174 = scmp.eq.s32.totalorder %s35, 1
      %p175 = scmp.ne.s32.totalorder %s170, %s172
      %p176 = scmp.eq.s32.totalorder %s35, 0
      %p177 = por %p175, %p176
      %p178 = scmp.ne.s32.totalorder %s170, %s172
      %p179 = scmp.eq.s32.totalorder %s40, 1
      %p180 = por %p178, %p179
      %p181 = scmp.ne.s32.totalorder %s172, %s173
      %p182 = scmp.eq.s32.totalorder %s40, 0
      %p183 = por %p181, %p182
      %p184 = scmp.ne.s32.totalorder %s172, %s173
      %p185 = scmp.eq.s32.totalorder %s41, 1
      %p186 = por %p184, %p185
      %p188 = scmp.ne.s32.totalorder %s173, %s187
      %p189 = scmp.eq.s32.totalorder %s41, 0
      %p190 = por %p188, %p189
      %s192 = sadd.s32 %s191, 1
      %p195 = scmp.eq.s32.totalorder %s35, 1
      %p196 = scmp.ne.s32.totalorder %s191, %s193
      %p197 = scmp.eq.s32.totalorder %s35, 0
      %p198 = por %p196, %p197
      %p199 = scmp.ne.s32.totalorder %s191, %s193
      %p200 = scmp.eq.s32.totalorder %s40, 1
      %p201 = por %p199, %p200
      %p202 = scmp.ne.s32.totalorder %s193, %s194
      %p203 = scmp.eq.s32.totalorder %s40, 0
      %p204 = por %p202, %p203
      %p205 = scmp.ne.s32.totalorder %s193, %s194
      %p206 = scmp.eq.s32.totalorder %s41, 1
      %p207 = por %p205, %p206
      %p209 = scmp.ne.s32.totalorder %s194, %s208
      %p210 = scmp.eq.s32.totalorder %s41, 0
      %p211 = por %p209, %p210
      %s213 = sadd.s32 %s212, 1
      %p216 = scmp.eq.s32.totalorder %s35, 1
      %p217 = scmp.ne.s32.totalorder %s212, %s214
      %p218 = scmp.eq.s32.totalorder %s35, 0
      %p219 = por %p217, %p218
      %p220 = scmp.ne.s32.totalorder %s212, %s214
      %p221 = scmp.eq.s32.totalorder %s40, 1
      %p222 = por %p220, %p221
      %p223 = scmp.ne.s32.totalorder %s214, %s215
      %p224 = scmp.eq.s32.totalorder %s40, 0
      %p225 = por %p223, %p224
      %p226 = scmp.ne.s32.totalorder %s214, %s215
      %p227 = scmp.eq.s32.totalorder %s41, 1
      %p228 = por %p226, %p227
      %p230 = scmp.ne.s32.totalorder %s215, %s229
      %p231 = scmp.eq.s32.totalorder %s41, 0
      %p232 = por %p230, %p231
      %s234 = sadd.s32 %s233, 1
      %p237 = scmp.eq.s32.totalorder %s35, 1
      %p238 = scmp.ne.s32.totalorder %s233, %s235
      %p239 = scmp.eq.s32.totalorder %s35, 0
      %p240 = por %p238, %p239
      %p241 = scmp.ne.s32.totalorder %s233, %s235
      %p242 = scmp.eq.s32.totalorder %s40, 1
      %p243 = por %p241, %p242
      %p244 = scmp.ne.s32.totalorder %s235, %s236
      %p245 = scmp.eq.s32.totalorder %s40, 0
      %p246 = por %p244, %p245
      %p247 = scmp.ne.s32.totalorder %s235, %s236
      %p248 = scmp.eq.s32.totalorder %s41, 1
      %p249 = por %p247, %p248
      %p251 = scmp.ne.s32.totalorder %s236, %s250
      %p252 = scmp.eq.s32.totalorder %s41, 0
      %p253 = por %p251, %p252
      %s255 = sadd.s32 %s254, 1
      %p258 = scmp.eq.s32.totalorder %s35, 1
      %p259 = scmp.ne.s32.totalorder %s254, %s256
      %p260 = scmp.eq.s32.totalorder %s35, 0
      %p261 = por %p259, %p260
      %p262 = scmp.ne.s32.totalorder %s254, %s256
      %p263 = scmp.eq.s32.totalorder %s40, 1
      %p264 = por %p262, %p263
      %p265 = scmp.ne.s32.totalorder %s256, %s257
      %p266 = scmp.eq.s32.totalorder %s40, 0
      %p267 = por %p265, %p266
      %p268 = scmp.ne.s32.totalorder %s256, %s257
      %p269 = scmp.eq.s32.totalorder %s41, 1
      %p270 = por %p268, %p269
      %p272 = scmp.ne.s32.totalorder %s257, %s271
      %p273 = scmp.eq.s32.totalorder %s41, 0
      %p274 = por %p272, %p273
      %s276 = sadd.s32 %s275, 1
      %p279 = scmp.eq.s32.totalorder %s35, 1
      %p280 = scmp.ne.s32.totalorder %s275, %s277
      %p281 = scmp.eq.s32.totalorder %s35, 0
      %p282 = por %p280, %p281
      %p283 = scmp.ne.s32.totalorder %s275, %s277
      %p284 = scmp.eq.s32.totalorder %s40, 1
      %p285 = por %p283, %p284
      %p286 = scmp.ne.s32.totalorder %s277, %s278
      %p287 = scmp.eq.s32.totalorder %s40, 0
      %p288 = por %p286, %p287
      %p289 = scmp.ne.s32.totalorder %s277, %s278
      %p290 = scmp.eq.s32.totalorder %s41, 1
      %p291 = por %p289, %p290
      %p293 = scmp.ne.s32.totalorder %s278, %s292
      %p294 = scmp.eq.s32.totalorder %s41, 0
      %p295 = por %p293, %p294
      %s297 = sadd.s32 %s296, 1
      %p300 = scmp.eq.s32.totalorder %s35, 1
      %p301 = scmp.ne.s32.totalorder %s296, %s298
      %p302 = scmp.eq.s32.totalorder %s35, 0
      %p303 = por %p301, %p302
      %p304 = scmp.ne.s32.totalorder %s296, %s298
      %p305 = scmp.eq.s32.totalorder %s40, 1
      %p306 = por %p304, %p305
      %p307 = scmp.ne.s32.totalorder %s298, %s299
      %p308 = scmp.eq.s32.totalorder %s40, 0
      %p309 = por %p307, %p308
      %p310 = scmp.ne.s32.totalorder %s298, %s299
      %p311 = scmp.eq.s32.totalorder %s41, 1
      %p312 = por %p310, %p311
      %p314 = scmp.ne.s32.totalorder %s299, %s313
      %p315 = scmp.eq.s32.totalorder %s41, 0
      %p316 = por %p314, %p315
      %s318 = sadd.s32 %s317, 1
      %p321 = scmp.eq.s32.totalorder %s35, 1
      %p322 = scmp.ne.s32.totalorder %s317, %s319
      %p323 = scmp.eq.s32.totalorder %s35, 0
      %p324 = por %p322, %p323
      %p325 = scmp.ne.s32.totalorder %s317, %s319
      %p326 = scmp.eq.s32.totalorder %s40, 1
      %p327 = por %p325, %p326
      %p328 = scmp.ne.s32.totalorder %s319, %s320
      %p329 = scmp.eq.s32.totalorder %s40, 0
      %p330 = por %p328, %p329
      %p331 = scmp.ne.s32.totalorder %s319, %s320
      %p332 = scmp.eq.s32.totalorder %s41, 1
      %p333 = por %p331, %p332
      %p335 = scmp.ne.s32.totalorder %s320, %s334
      %p336 = scmp.eq.s32.totalorder %s41, 0
      %p337 = por %p335, %p336
      %s339 = sadd.s32 %s338, 1
      %p342 = scmp.eq.s32.totalorder %s35, 1
      %p343 = scmp.ne.s32.totalorder %s338, %s340
      %p344 = scmp.eq.s32.totalorder %s35, 0
      %p345 = por %p343, %p344
      %p346 = scmp.ne.s32.totalorder %s338, %s340
      %p347 = scmp.eq.s32.totalorder %s40, 1
      %p348 = por %p346, %p347
      %p349 = scmp.ne.s32.totalorder %s340, %s341
      %p350 = scmp.eq.s32.totalorder %s40, 0
      %p351 = por %p349, %p350
      %p352 = scmp.ne.s32.totalorder %s340, %s341
      %p353 = scmp.eq.s32.totalorder %s41, 1
      %p354 = por %p352, %p353
      %p356 = scmp.ne.s32.totalorder %s341, %s355
      %p357 = scmp.eq.s32.totalorder %s41, 0
      %p358 = por %p356, %p357
      %s359 = ssub.s32 %s42, %s54
      %s360 = ssub.s32 %s43, %s50
      %s361 = sor.u32 %s359, %s360
      %p362 = scmp.eq.s32.totalorder %s361, 0
      %s364 = sadd.s32 %s363, 1
      %s365 = scalar_select %p362, %s363, %s364
      %p368 = pneg %p362
      %p369 = scmp.eq.s32.totalorder %s35, 1
      %p370 = por %p368, %p369
      %p371 = scmp.ne.s32.totalorder %s363, %s366
      %p372 = scmp.eq.s32.totalorder %s35, 0
      %p373 = por %p371, %p372
      %p374 = scmp.ne.s32.totalorder %s363, %s366
      %p375 = scmp.eq.s32.totalorder %s40, 1
      %p376 = por %p374, %p375
      %p377 = scmp.ne.s32.totalorder %s366, %s367
      %p378 = scmp.eq.s32.totalorder %s40, 0
      %p379 = por %p377, %p378
      %p380 = scmp.ne.s32.totalorder %s366, %s367
      %p381 = scmp.eq.s32.totalorder %s41, 1
      %p382 = por %p380, %p381
      %p384 = scmp.ne.s32.totalorder %s367, %s383
      %p385 = scmp.eq.s32.totalorder %s41, 0
      %p386 = por %p384, %p385
      %p387 = scmp.le.s32.totalorder 1, %s35
      %p388 = scmp.lt.s32.totalorder %s35, 3
      %p389 = pnand %p387, %p388
      %p390 = pneg %p389
      // Predicated region
      $region9: #{tpu_custom_call.1} parent=5 // pred_check
        _
      $region10: #{tpu_custom_call.1} parent=5 // pred_check_branch
        %392 = sbr.rel (%p389) target = $region12
      $region11: #{tpu_custom_call.1} parent=5 // pred_region
        %s393 = ssub.s32 %s35, 1
        // Predicated region
        $region13: #{tpu_custom_call.1} parent=11 // pred_check
          %p394 = pneg %p120
        $region14: #{tpu_custom_call.1} parent=11 // pred_check_branch
          %396 = sbr.rel (%p394) target = $region16
        $region15: #{tpu_custom_call.1} parent=11 // pred_region
          %s398 = ssub.s32 256, 256
          %399 = vsyncadd [#allocation9], %s398
          %s400 = sshll.u32 [#allocation10], 4
          %s401 = int_to_ptr.vmem [resolvable:$true] %s400
          %406 = dma.hbm_to_vmem [thread:$0]  %s2, 256, %s401, [#allocation9], 64, 64, 4
        $region16: #{tpu_custom_call.1} parent=11 // pred_fallthru
          _
        // Predicated region
        $region17: #{tpu_custom_call.1} parent=11 // pred_check
          %p407 = pneg %p141
        $region18: #{tpu_custom_call.1} parent=11 // pred_check_branch
          %409 = sbr.rel (%p407) target = $region20
        $region19: #{tpu_custom_call.1} parent=11 // pred_region
          %s411 = ssub.s32 16, 16
          %412 = vsyncadd [#allocation12], %s411
          %s414 = sshll.u32 [#allocation11], 4
          %s415 = int_to_ptr.vmem [resolvable:$true] %s414
          %417 = dma.hbm_to_vmem [thread:$0]  %s3, 16, %s415, [#allocation12]
        $region20: #{tpu_custom_call.1} parent=11 // pred_fallthru
          _
        // Predicated region
        $region21: #{tpu_custom_call.1} parent=11 // pred_check
          %p418 = pneg %p162
        $region22: #{tpu_custom_call.1} parent=11 // pred_check_branch
          %420 = sbr.rel (%p418) target = $region24
        $region23: #{tpu_custom_call.1} parent=11 // pred_region
          %s422 = ssub.s32 256, 256
          %423 = vsyncadd [#allocation12], %s422
          %s424 = sshll.u32 [#allocation13], 4
          %s425 = int_to_ptr.vmem [resolvable:$true] %s424
          %430 = dma.hbm_to_vmem [thread:$0]  %s4, 256, %s425, [#allocation12], 64, 64, 4
        $region24: #{tpu_custom_call.1} parent=11 // pred_fallthru
          _
        // Predicated region
        $region25: #{tpu_custom_call.1} parent=11 // pred_check
          %p431 = pneg %p183
        $region26: #{tpu_custom_call.1} parent=11 // pred_check_branch
          %433 = sbr.rel (%p431) target = $region28
        $region27: #{tpu_custom_call.1} parent=11 // pred_region
          %s435 = ssub.s32 16, 16
          %436 = vsyncadd [#allocation15], %s435
          %s438 = sshll.u32 [#allocation14], 4
          %s439 = int_to_ptr.vmem [resolvable:$true] %s438
          %441 = dma.hbm_to_vmem [thread:$0]  %s5, 16, %s439, [#allocation15]
        $region28: #{tpu_custom_call.1} parent=11 // pred_fallthru
          _
        // Predicated region
        $region29: #{tpu_custom_call.1} parent=11 // pred_check
          %p442 = pneg %p204
        $region30: #{tpu_custom_call.1} parent=11 // pred_check_branch
          %444 = sbr.rel (%p442) target = $region32
        $region31: #{tpu_custom_call.1} parent=11 // pred_region
          %s446 = ssub.s32 16, 16
          %447 = vsyncadd [#allocation15], %s446
          %s449 = sshll.u32 [#allocation16], 4
          %s450 = int_to_ptr.vmem [resolvable:$true] %s449
          %452 = dma.hbm_to_vmem [thread:$0]  %s6, 16, %s450, [#allocation15]
        $region32: #{tpu_custom_call.1} parent=11 // pred_fallthru
          _
        // Predicated region
        $region33: #{tpu_custom_call.1} parent=11 // pred_check
          %p453 = pneg %p225
        $region34: #{tpu_custom_call.1} parent=11 // pred_check_branch
          %455 = sbr.rel (%p453) target = $region36
        $region35: #{tpu_custom_call.1} parent=11 // pred_region
          %s457 = ssub.s32 16, 16
          %458 = vsyncadd [#allocation18], %s457
          %s460 = sshll.u32 [#allocation17], 4
          %s461 = int_to_ptr.vmem [resolvable:$true] %s460
          %463 = dma.hbm_to_vmem [thread:$0]  %s7, 16, %s461, [#allocation18]
        $region36: #{tpu_custom_call.1} parent=11 // pred_fallthru
          _
        // Predicated region
        $region37: #{tpu_custom_call.1} parent=11 // pred_check
          %p464 = pneg %p246
        $region38: #{tpu_custom_call.1} parent=11 // pred_check_branch
          %466 = sbr.rel (%p464) target = $region40
        $region39: #{tpu_custom_call.1} parent=11 // pred_region
          %s468 = ssub.s32 256, 256
          %469 = vsyncadd [#allocation18], %s468
          %s470 = sshll.u32 [#allocation19], 4
          %s471 = int_to_ptr.vmem [resolvable:$true] %s470
          %476 = dma.hbm_to_vmem [thread:$0]  %s8, 256, %s471, [#allocation18], 64, 64, 4
        $region40: #{tpu_custom_call.1} parent=11 // pred_fallthru
          _
        // Predicated region
        $region41: #{tpu_custom_call.1} parent=11 // pred_check
          %p477 = pneg %p267
        $region42: #{tpu_custom_call.1} parent=11 // pred_check_branch
          %479 = sbr.rel (%p477) target = $region44
        $region43: #{tpu_custom_call.1} parent=11 // pred_region
          %s481 = ssub.s32 16, 16
          %482 = vsyncadd [#allocation21], %s481
          %s484 = sshll.u32 [#allocation20], 4
          %s485 = int_to_ptr.vmem [resolvable:$true] %s484
          %487 = dma.hbm_to_vmem [thread:$0]  %s9, 16, %s485, [#allocation21]
        $region44: #{tpu_custom_call.1} parent=11 // pred_fallthru
          _
        // Predicated region
        $region45: #{tpu_custom_call.1} parent=11 // pred_check
          %p488 = pneg %p288
        $region46: #{tpu_custom_call.1} parent=11 // pred_check_branch
          %490 = sbr.rel (%p488) target = $region48
        $region47: #{tpu_custom_call.1} parent=11 // pred_region
          %s492 = ssub.s32 512, 512
          %493 = vsyncadd [#allocation21], %s492
          %s494 = sshll.u32 [#allocation22], 4
          %s495 = int_to_ptr.vmem [resolvable:$true] %s494
          %500 = dma.hbm_to_vmem [thread:$0]  %s10, 512, %s495, [#allocation21], 64, 64, 4
        $region48: #{tpu_custom_call.1} parent=11 // pred_fallthru
          _
        // Predicated region
        $region49: #{tpu_custom_call.1} parent=11 // pred_check
          %p501 = pneg %p309
        $region50: #{tpu_custom_call.1} parent=11 // pred_check_branch
          %503 = sbr.rel (%p501) target = $region52
        $region51: #{tpu_custom_call.1} parent=11 // pred_region
          %s505 = ssub.s32 16, 16
          %506 = vsyncadd [#allocation24], %s505
          %s508 = sshll.u32 [#allocation23], 4
          %s509 = int_to_ptr.vmem [resolvable:$true] %s508
          %511 = dma.hbm_to_vmem [thread:$0]  %s11, 16, %s509, [#allocation24]
        $region52: #{tpu_custom_call.1} parent=11 // pred_fallthru
          _
        // Predicated region
        $region53: #{tpu_custom_call.1} parent=11 // pred_check
          %p512 = pneg %p330
        $region54: #{tpu_custom_call.1} parent=11 // pred_check_branch
          %514 = sbr.rel (%p512) target = $region56
        $region55: #{tpu_custom_call.1} parent=11 // pred_region
          %s516 = ssub.s32 16, 16
          %517 = vsyncadd [#allocation24], %s516
          %s519 = sshll.u32 [#allocation25], 4
          %s520 = int_to_ptr.vmem [resolvable:$true] %s519
          %522 = dma.hbm_to_vmem [thread:$0]  %s12, 16, %s520, [#allocation24]
        $region56: #{tpu_custom_call.1} parent=11 // pred_fallthru
          _
        // Predicated region
        $region57: #{tpu_custom_call.1} parent=11 // pred_check
          %p523 = pneg %p351
        $region58: #{tpu_custom_call.1} parent=11 // pred_check_branch
          %525 = sbr.rel (%p523) target = $region60
        $region59: #{tpu_custom_call.1} parent=11 // pred_region
          %s527 = ssub.s32 16, 16
          %528 = vsyncadd [#allocation27], %s527
          %s530 = sshll.u32 [#allocation26], 4
          %s531 = int_to_ptr.vmem [resolvable:$true] %s530
          %533 = dma.hbm_to_vmem [thread:$0]  %s13, 16, %s531, [#allocation27]
        $region60: #{tpu_custom_call.1} parent=11 // pred_fallthru
          _
      $region12: #{tpu_custom_call.1} parent=5 // pred_fallthru
        _
      %p534 = scmp.lt.s32.totalorder %s35, 2
      // Predicated region
      $region61: #{tpu_custom_call.1} parent=5 // pred_check
        %p535 = pneg %p534
      $region62: #{tpu_custom_call.1} parent=5 // pred_check_branch
        %537 = sbr.rel (%p535) target = $region64
      $region63: #{tpu_custom_call.1} parent=5 // pred_region
        // Predicated region
        $region65: #{tpu_custom_call.1} parent=63 // pred_check
          %p538 = pneg %p67
        $region66: #{tpu_custom_call.1} parent=63 // pred_check_branch
          %540 = sbr.rel (%p538) target = $region68
        $region67: #{tpu_custom_call.1} parent=63 // pred_region
          %s541 = sand.u32 %s57, 1
          %s542 = scalar_lea.sflag [#allocation6], %s541
          %s543 = sand.u32 %s57, 1
          %s544 = smul.addr %s543, 8
          %s545 = scalar_lea.vmem [#allocation5], %s544
          %s547 = ssub.s32 128, 128
          %548 = vsyncadd %s542, %s547
          %s549 = smul.addr %s42, 128
          %s550 = scalar_lea.hbm %s0, %s549
          %s552 = sshll.u32 %s545, 4
          %s553 = int_to_ptr.vmem [resolvable:$true] %s552
          %555 = dma.hbm_to_vmem [thread:$0]  %s550, 128, %s553, %s542
        $region68: #{tpu_custom_call.1} parent=63 // pred_fallthru
          _
        // Predicated region
        $region69: #{tpu_custom_call.1} parent=63 // pred_check
          %p556 = pneg %p93
        $region70: #{tpu_custom_call.1} parent=63 // pred_check_branch
          %558 = sbr.rel (%p556) target = $region72
        $region71: #{tpu_custom_call.1} parent=63 // pred_region
          %s559 = sand.u32 %s35, 1
          %s560 = scalar_lea.sflag [#allocation9], %s559
          %s561 = sand.u32 %s83, 1
          %s562 = scalar_lea.vmem [#allocation8], %s561
          %s564 = ssub.s32 16, 16
          %565 = vsyncadd %s560, %s564
          %s566 = smul.addr %s42, 16
          %s567 = scalar_lea.hbm %s1, %s566
          %s569 = sshll.u32 %s562, 4
          %s570 = int_to_ptr.vmem [resolvable:$true] %s569
          %572 = dma.hbm_to_vmem [thread:$0]  %s567, 16, %s570, %s560
        $region72: #{tpu_custom_call.1} parent=63 // pred_fallthru
          _
      $region64: #{tpu_custom_call.1} parent=5 // pred_fallthru
        _
      %p573 = scmp.le.s32.totalorder 1, %s35
      %p574 = scmp.lt.s32.totalorder %s35, 3
      %p575 = pnand %p573, %p574
      %p576 = pneg %p575
      // Predicated region
      $region73: #{tpu_custom_call.1} parent=5 // pred_check
        _
      $region74: #{tpu_custom_call.1} parent=5 // pred_check_branch
        %578 = sbr.rel (%p575) target = $region76
      $region75: #{tpu_custom_call.1} parent=5 // pred_region
        %s579 = ssub.s32 %s35, 1
        %s580 = sand.u32 %s60, 1
        %s581 = scalar_lea.sflag [#allocation6], %s580
        %s582 = sand.u32 %s60, 1
        %s583 = smul.addr %s582, 8
        %s584 = scalar_lea.vmem [#allocation5], %s583
        // Predicated region
        $region77: #{tpu_custom_call.1} parent=75 // pred_check
          %p585 = pneg %p73
        $region78: #{tpu_custom_call.1} parent=75 // pred_check_branch
          %587 = sbr.rel (%p585) target = $region80
        $region79: #{tpu_custom_call.1} parent=75 // pred_region
          %588 = dma.done %s581, 128
        $region80: #{tpu_custom_call.1} parent=75 // pred_fallthru
          _
        %s589 = sand.u32 %s40, 1
        %s590 = scalar_lea.sflag [#allocation9], %s589
        %s591 = sand.u32 %s86, 1
        %s592 = scalar_lea.vmem [#allocation8], %s591
        // Predicated region
        $region81: #{tpu_custom_call.1} parent=75 // pred_check
          %p593 = pneg %p99
        $region82: #{tpu_custom_call.1} parent=75 // pred_check_branch
          %595 = sbr.rel (%p593) target = $region84
        $region83: #{tpu_custom_call.1} parent=75 // pred_region
          %596 = dma.done %s590, 16
        $region84: #{tpu_custom_call.1} parent=75 // pred_fallthru
          _
        // Predicated region
        $region85: #{tpu_custom_call.1} parent=75 // pred_check
          %p597 = pneg %p120
        $region86: #{tpu_custom_call.1} parent=75 // pred_check_branch
          %599 = sbr.rel (%p597) target = $region88
        $region87: #{tpu_custom_call.1} parent=75 // pred_region
          %600 = dma.done [#allocation9], 256
        $region88: #{tpu_custom_call.1} parent=75 // pred_fallthru
          _
        // Predicated region
        $region89: #{tpu_custom_call.1} parent=75 // pred_check
          %p601 = pneg %p141
        $region90: #{tpu_custom_call.1} parent=75 // pred_check_branch
          %603 = sbr.rel (%p601) target = $region92
        $region91: #{tpu_custom_call.1} parent=75 // pred_region
          %604 = dma.done [#allocation12], 16
        $region92: #{tpu_custom_call.1} parent=75 // pred_fallthru
          _
        // Predicated region
        $region93: #{tpu_custom_call.1} parent=75 // pred_check
          %p605 = pneg %p162
        $region94: #{tpu_custom_call.1} parent=75 // pred_check_branch
          %607 = sbr.rel (%p605) target = $region96
        $region95: #{tpu_custom_call.1} parent=75 // pred_region
          %608 = dma.done [#allocation12], 256
        $region96: #{tpu_custom_call.1} parent=75 // pred_fallthru
          _
        // Predicated region
        $region97: #{tpu_custom_call.1} parent=75 // pred_check
          %p609 = pneg %p183
        $region98: #{tpu_custom_call.1} parent=75 // pred_check_branch
          %611 = sbr.rel (%p609) target = $region100
        $region99: #{tpu_custom_call.1} parent=75 // pred_region
          %612 = dma.done [#allocation15], 16
        $region100: #{tpu_custom_call.1} parent=75 // pred_fallthru
          _
        // Predicated region
        $region101: #{tpu_custom_call.1} parent=75 // pred_check
          %p613 = pneg %p204
        $region102: #{tpu_custom_call.1} parent=75 // pred_check_branch
          %615 = sbr.rel (%p613) target = $region104
        $region103: #{tpu_custom_call.1} parent=75 // pred_region
          %616 = dma.done [#allocation15], 16
        $region104: #{tpu_custom_call.1} parent=75 // pred_fallthru
          _
        // Predicated region
        $region105: #{tpu_custom_call.1} parent=75 // pred_check
          %p617 = pneg %p225
        $region106: #{tpu_custom_call.1} parent=75 // pred_check_branch
          %619 = sbr.rel (%p617) target = $region108
        $region107: #{tpu_custom_call.1} parent=75 // pred_region
          %620 = dma.done [#allocation18], 16
        $region108: #{tpu_custom_call.1} parent=75 // pred_fallthru
          _
        // Predicated region
        $region109: #{tpu_custom_call.1} parent=75 // pred_check
          %p621 = pneg %p246
        $region110: #{tpu_custom_call.1} parent=75 // pred_check_branch
          %623 = sbr.rel (%p621) target = $region112
        $region111: #{tpu_custom_call.1} parent=75 // pred_region
          %624 = dma.done [#allocation18], 256
        $region112: #{tpu_custom_call.1} parent=75 // pred_fallthru
          _
        // Predicated region
        $region113: #{tpu_custom_call.1} parent=75 // pred_check
          %p625 = pneg %p267
        $region114: #{tpu_custom_call.1} parent=75 // pred_check_branch
          %627 = sbr.rel (%p625) target = $region116
        $region115: #{tpu_custom_call.1} parent=75 // pred_region
          %628 = dma.done [#allocation21], 16
        $region116: #{tpu_custom_call.1} parent=75 // pred_fallthru
          _
        // Predicated region
        $region117: #{tpu_custom_call.1} parent=75 // pred_check
          %p629 = pneg %p288
        $region118: #{tpu_custom_call.1} parent=75 // pred_check_branch
          %631 = sbr.rel (%p629) target = $region120
        $region119: #{tpu_custom_call.1} parent=75 // pred_region
          %632 = dma.done [#allocation21], 512
        $region120: #{tpu_custom_call.1} parent=75 // pred_fallthru
          _
        // Predicated region
        $region121: #{tpu_custom_call.1} parent=75 // pred_check
          %p633 = pneg %p309
        $region122: #{tpu_custom_call.1} parent=75 // pred_check_branch
          %635 = sbr.rel (%p633) target = $region124
        $region123: #{tpu_custom_call.1} parent=75 // pred_region
          %636 = dma.done [#allocation24], 16
        $region124: #{tpu_custom_call.1} parent=75 // pred_fallthru
          _
        // Predicated region
        $region125: #{tpu_custom_call.1} parent=75 // pred_check
          %p637 = pneg %p330
        $region126: #{tpu_custom_call.1} parent=75 // pred_check_branch
          %639 = sbr.rel (%p637) target = $region128
        $region127: #{tpu_custom_call.1} parent=75 // pred_region
          %640 = dma.done [#allocation24], 16
        $region128: #{tpu_custom_call.1} parent=75 // pred_fallthru
          _
        // Predicated region
        $region129: #{tpu_custom_call.1} parent=75 // pred_check
          %p641 = pneg %p351
        $region130: #{tpu_custom_call.1} parent=75 // pred_check_branch
          %643 = sbr.rel (%p641) target = $region132
        $region131: #{tpu_custom_call.1} parent=75 // pred_region
          %644 = dma.done [#allocation27], 16
        $region132: #{tpu_custom_call.1} parent=75 // pred_fallthru
          _
        %s645 = sand.u32 %s60, 1
        %s646 = scalar_lea.sflag [#allocation6], %s645
        %s647 = sand.u32 %s60, 1
        %s648 = smul.addr %s647, 8
        %s649 = scalar_lea.vmem [#allocation5], %s648
        %p650 = pneg %p73
        %p651 = pneg %p70
        %s652 = sand.u32 %s40, 1
        %s653 = scalar_lea.sflag [#allocation9], %s652
        %s654 = sand.u32 %s86, 1
        %s655 = scalar_lea.vmem [#allocation8], %s654
        %p656 = pneg %p99
        %p657 = pneg %p96
        %p658 = pneg %p120
        %p659 = pneg %p117
        %p660 = pneg %p141
        %p661 = pneg %p138
        %p662 = pneg %p162
        %p663 = pneg %p159
        %p664 = pneg %p183
        %p665 = pneg %p180
        %p666 = pneg %p204
        %p667 = pneg %p201
        %p668 = pneg %p225
        %p669 = pneg %p222
        %p670 = pneg %p246
        %p671 = pneg %p243
        %p672 = pneg %p267
        %p673 = pneg %p264
        %p674 = pneg %p288
        %p675 = pneg %p285
        %p676 = pneg %p309
        %p677 = pneg %p306
        %p678 = pneg %p330
        %p679 = pneg %p327
        %p680 = pneg %p351
        %p681 = pneg %p348
        %p682 = pneg %p379
        %p683 = pneg %p376
        %s684 = sand.u32 %s366, 1
        %s685 = scalar_lea.sflag [#allocation7], %s684
        %s686 = sand.u32 %s366, 1
        %s687 = smul.addr %s686, 8
        %s688 = scalar_lea.vmem [#allocation28], %s687
        %p690 = scmp.eq.s32.totalorder %s45, 0
        // Predicated region
        $region133: #{tpu_custom_call.1} parent=75 // pred_check
          %p691 = pneg %p690
        $region134: #{tpu_custom_call.1} parent=75 // pred_check_branch
          %693 = sbr.rel (%p691) target = $region136
        $region135: #{tpu_custom_call.1} parent=75 // pred_region
          %v694 = vld [vmem:[%s584] sm:$0xff]
          %v695 = vpack.c.bf16 %v694, %v694
          %v696 = vld [vmem:[#allocation10] sm:$0xf]
          %v697 = vld [vmem:[#allocation10 + $0x4] sm:$0xf]
          %v698 = vld [vmem:[#allocation10 + $0x8] sm:$0xf]
          %v699 = vld [vmem:[#allocation10 + $0xc] sm:$0xf]
          %v700 = vld [vmem:[#allocation11] sm:$0x1]
          %v702 = vlaneseq
          %v703 = vshrl.u32 %v702, 7
          %v704 = vsub.s32 0, %v703
          %v705 = vrot.slane %v700, %v704
          %v711 = vunpack.c.l.b16 %v696
          %v712 = vunpack.c.l.b16 %v697
          %v713 = vunpack.c.l.b16 %v698
          %v714 = vunpack.c.l.b16 %v699
          %v715 = vpack.c.b16 %v712, %v711
          %v716 = vpack.c.b16 %v714, %v713
          %vm719 = vcmask 261120
          %v721 = vsel %vm719, %v695, 0
          %723 = vmatprep.subr.bf16.mxu0 0
          %724 = vmatpush1.bf16.msra.mxu0 %v715
          %725 = vmatprep.subr.bf16.mxu0 0
          %726 = vmatpush1.bf16.msra.mxu0 %v716
          %727 = vmatprep.subr.bf16.mxu0 0
          %728 = vmatpush1.bf16.msra.mxu0 0
          %729 = vmatprep.subr.bf16.mxu0 0
          %730 = vmatpush1.bf16.msra.mxu0 0
          %731 = vmatprep.subr.bf16.mxu0 0
          %732 = vmatpush1.bf16.msra.mxu0 0
          %733 = vmatprep.subr.bf16.mxu0 0
          %734 = vmatpush1.bf16.msra.mxu0 0
          %735 = vmatprep.subr.bf16.mxu0 0
          %736 = vmatpush1.bf16.msra.mxu0 0
          %737 = vmatprep.subr.bf16.mxu0 0
          %738 = vmatpush1.bf16.msra.mxu0 0
          %739 = vmatprep.subr.bf16.mxu0 0
          %740 = vmatpush1.bf16.msra.mxu0 0
          %741 = vmatprep.subr.bf16.mxu0 0
          %742 = vmatpush1.bf16.msra.mxu0 0
          %743 = vmatprep.subr.bf16.mxu0 0
          %744 = vmatpush1.bf16.msra.mxu0 0
          %745 = vmatprep.subr.bf16.mxu0 0
          %746 = vmatpush1.bf16.msra.mxu0 0
          %747 = vmatprep.subr.bf16.mxu0 0
          %748 = vmatpush1.bf16.msra.mxu0 0
          %749 = vmatprep.subr.bf16.mxu0 0
          %750 = vmatpush1.bf16.msra.mxu0 0
          %751 = vmatprep.subr.bf16.mxu0 0
          %752 = vmatpush1.bf16.msra.mxu0 0
          %753 = vmatprep.subr.bf16.mxu0 0
          %754 = vmatpush1.bf16.msra.mxu0 0
          %755 = vmatprep.mubr.bf16.mxu0 0
          %756 = vmatmul.mubr.bf16.gmra.mrb[0].mxu0 %v721
          %v757 = vpop.f32.mrb[0].mxu0
          %v758 = vadd.f32 %v705, %v757
          %v759 = vpop.f32.mrb[0].mxu0
          %v760 = vpop.f32.mrb[0].mxu0
          %v761 = vpop.f32.mrb[0].mxu0
          %762 = vdwg.mxu0
          %v763 = vmul.f32 %v758, 0.35355338
          %765 = vrot.lane.b32.xlu0 %v763, 120
          %v766 = vpop.permute.xlu0 %765
          %768 = vrot.lane.b32.xlu0 %v763, 112
          %v769 = vpop.permute.xlu0 %768
          %771 = vrot.lane.b32.xlu0 %v763, 104
          %v772 = vpop.permute.xlu0 %771
          %v774 = vcombine.low %v763, %v769
          %v775 = vcombine.high %v763, %v769
          %v777 = vunpack.c.l.s4 1983009808
          %v778 = vunpack.c.0.s8 %v777
          %v779 = vlaneseq
          %v780 = vshrl.u32 %v779, 7
          %v781 = vsub.s32 %v778, %v780
          %v782 = vrot.slane %v774, %v781
          %v784 = vunpack.c.l.s4 1983009808
          %v785 = vunpack.c.0.s8 %v784
          %v786 = vlaneseq
          %v787 = vshrl.u32 %v786, 7
          %v788 = vsub.s32 %v785, %v787
          %v789 = vrot.slane %v775, %v788
          %v790 = vcombine.low %v766, %v772
          %v791 = vcombine.high %v766, %v772
          %v793 = vunpack.c.l.s4 1983009808
          %v794 = vunpack.c.0.s8 %v793
          %v795 = vlaneseq
          %v796 = vshrl.u32 %v795, 7
          %v797 = vsub.s32 %v794, %v796
          %v798 = vrot.slane %v790, %v797
          %v800 = vunpack.c.l.s4 1983009808
          %v801 = vunpack.c.0.s8 %v800
          %v802 = vlaneseq
          %v803 = vshrl.u32 %v802, 7
          %v804 = vsub.s32 %v801, %v803
          %v805 = vrot.slane %v791, %v804
          %v806 = vcombine.low %v782, %v798
          %v807 = vcombine.high %v782, %v798
          %v809 = vunpack.c.l.s4 1934713408
          %v810 = vunpack.c.0.s8 %v809
          %v811 = vlaneseq
          %v812 = vshrl.u32 %v811, 7
          %v813 = vsub.s32 %v810, %v812
          %v814 = vrot.slane %v806, %v813
          %v816 = vunpack.c.l.s4 1934713408
          %v817 = vunpack.c.0.s8 %v816
          %v818 = vlaneseq
          %v819 = vshrl.u32 %v818, 7
          %v820 = vsub.s32 %v817, %v819
          %v821 = vrot.slane %v807, %v820
          %v822 = vcombine.low %v789, %v805
          %v823 = vcombine.high %v789, %v805
          %v825 = vunpack.c.l.s4 1934713408
          %v826 = vunpack.c.0.s8 %v825
          %v827 = vlaneseq
          %v828 = vshrl.u32 %v827, 7
          %v829 = vsub.s32 %v826, %v828
          %v830 = vrot.slane %v822, %v829
          %v832 = vunpack.c.l.s4 1934713408
          %v833 = vunpack.c.0.s8 %v832
          %v834 = vlaneseq
          %v835 = vshrl.u32 %v834, 7
          %v836 = vsub.s32 %v833, %v835
          %v837 = vrot.slane %v823, %v836
          %v838 = vcombine.high %v814, 0.0
          %v839 = vcombine.high %v821, 0.0
          %v840 = vcombine.high %v830, 0.0
          %v841 = vcombine.high %v837, 0.0
          %v842 = vcombine.low %v814, %v821
          %v844 = vunpack.c.l.s4 1983009808
          %v845 = vunpack.c.0.s8 %v844
          %v846 = vlaneseq
          %v847 = vshrl.u32 %v846, 7
          %v848 = vsub.s32 %v845, %v847
          %v849 = vrot.slane %v842, %v848
          %v850 = vcombine.low %v838, %v839
          %v852 = vunpack.c.l.s4 1983009808
          %v853 = vunpack.c.0.s8 %v852
          %v854 = vlaneseq
          %v855 = vshrl.u32 %v854, 7
          %v856 = vsub.s32 %v853, %v855
          %v857 = vrot.slane %v850, %v856
          %v858 = vcombine.low %v830, %v837
          %v860 = vunpack.c.l.s4 1983009808
          %v861 = vunpack.c.0.s8 %v860
          %v862 = vlaneseq
          %v863 = vshrl.u32 %v862, 7
          %v864 = vsub.s32 %v861, %v863
          %v865 = vrot.slane %v858, %v864
          %v866 = vcombine.low %v840, %v841
          %v868 = vunpack.c.l.s4 1983009808
          %v869 = vunpack.c.0.s8 %v868
          %v870 = vlaneseq
          %v871 = vshrl.u32 %v870, 7
          %v872 = vsub.s32 %v869, %v871
          %v873 = vrot.slane %v866, %v872
          %v874 = vcombine.low %v849, %v857
          %v875 = vcombine.high %v849, %v857
          %v877 = vunpack.c.l.s4 1934713408
          %v878 = vunpack.c.0.s8 %v877
          %v879 = vlaneseq
          %v880 = vshrl.u32 %v879, 7
          %v881 = vsub.s32 %v878, %v880
          %v882 = vrot.slane %v874, %v881
          %v884 = vunpack.c.l.s4 1934713408
          %v885 = vunpack.c.0.s8 %v884
          %v886 = vlaneseq
          %v887 = vshrl.u32 %v886, 7
          %v888 = vsub.s32 %v885, %v887
          %v889 = vrot.slane %v875, %v888
          %v890 = vcombine.low %v865, %v873
          %v891 = vcombine.high %v865, %v873
          %v893 = vunpack.c.l.s4 1934713408
          %v894 = vunpack.c.0.s8 %v893
          %v895 = vlaneseq
          %v896 = vshrl.u32 %v895, 7
          %v897 = vsub.s32 %v894, %v896
          %v898 = vrot.slane %v890, %v897
          %v900 = vunpack.c.l.s4 1934713408
          %v901 = vunpack.c.0.s8 %v900
          %v902 = vlaneseq
          %v903 = vshrl.u32 %v902, 7
          %v904 = vsub.s32 %v901, %v903
          %v905 = vrot.slane %v891, %v904
          %v906 = vcombine.low %v882, %v898
          %v907 = vcombine.high %v882, %v898
          %v908 = vcombine.low %v889, %v905
          %v909 = vcombine.high %v889, %v905
          %v910 = vpack.c.bf16 %v906, %v906
          %v911 = vpack.c.bf16 %v907, %v907
          %v912 = vpack.c.bf16 %v908, %v908
          %v913 = vpack.c.bf16 %v909, %v909
          %vm914 = vcmask 60416
          %915 = vst.msk [vmem:[#allocation2] sm:$0xf] %vm914, %v910
          %916 = vst.msk [vmem:[#allocation2 + $0x4] sm:$0xf] %vm914, %v911
          %917 = vst.msk [vmem:[#allocation2 + $0x8] sm:$0xf] %vm914, %v912
          %918 = vst.msk [vmem:[#allocation2 + $0xc] sm:$0xf] %vm914, %v913
          %920 = vrot.lane.b32.xlu0 %v758, 120
          %v921 = vpop.permute.xlu0 %920
          %922 = vrot.lane.b32.xlu0 %v758, 112
          %v923 = vpop.permute.xlu0 %922
          %924 = vrot.lane.b32.xlu0 %v758, 104
          %v925 = vpop.permute.xlu0 %924
          %926 = vrot.lane.b32.xlu0 %v758, 96
          %v927 = vpop.permute.xlu0 %926
          %928 = vrot.lane.b32.xlu0 %v921, 96
          %v929 = vpop.permute.xlu0 %928
          %930 = vrot.lane.b32.xlu0 %v923, 96
          %v931 = vpop.permute.xlu0 %930
          %932 = vrot.lane.b32.xlu0 %v925, 96
          %v933 = vpop.permute.xlu0 %932
          %v938 = vcombine.low %v927, %v931
          %v939 = vcombine.high %v927, %v931
          %v941 = vunpack.c.l.s4 1983009808
          %v942 = vunpack.c.0.s8 %v941
          %v943 = vlaneseq
          %v944 = vshrl.u32 %v943, 7
          %v945 = vsub.s32 %v942, %v944
          %v946 = vrot.slane %v938, %v945
          %v948 = vunpack.c.l.s4 1983009808
          %v949 = vunpack.c.0.s8 %v948
          %v950 = vlaneseq
          %v951 = vshrl.u32 %v950, 7
          %v952 = vsub.s32 %v949, %v951
          %v953 = vrot.slane %v939, %v952
          %v954 = vcombine.low %v929, %v933
          %v955 = vcombine.high %v929, %v933
          %v957 = vunpack.c.l.s4 1983009808
          %v958 = vunpack.c.0.s8 %v957
          %v959 = vlaneseq
          %v960 = vshrl.u32 %v959, 7
          %v961 = vsub.s32 %v958, %v960
          %v962 = vrot.slane %v954, %v961
          %v964 = vunpack.c.l.s4 1983009808
          %v965 = vunpack.c.0.s8 %v964
          %v966 = vlaneseq
          %v967 = vshrl.u32 %v966, 7
          %v968 = vsub.s32 %v965, %v967
          %v969 = vrot.slane %v955, %v968
          %v970 = vcombine.low %v946, %v962
          %v971 = vcombine.high %v946, %v962
          %v973 = vunpack.c.l.s4 1934713408
          %v974 = vunpack.c.0.s8 %v973
          %v975 = vlaneseq
          %v976 = vshrl.u32 %v975, 7
          %v977 = vsub.s32 %v974, %v976
          %v978 = vrot.slane %v970, %v977
          %v980 = vunpack.c.l.s4 1934713408
          %v981 = vunpack.c.0.s8 %v980
          %v982 = vlaneseq
          %v983 = vshrl.u32 %v982, 7
          %v984 = vsub.s32 %v981, %v983
          %v985 = vrot.slane %v971, %v984
          %v986 = vcombine.low %v953, %v969
          %v987 = vcombine.high %v953, %v969
          %v989 = vunpack.c.l.s4 1934713408
          %v990 = vunpack.c.0.s8 %v989
          %v991 = vlaneseq
          %v992 = vshrl.u32 %v991, 7
          %v993 = vsub.s32 %v990, %v992
          %v994 = vrot.slane %v986, %v993
          %v996 = vunpack.c.l.s4 1934713408
          %v997 = vunpack.c.0.s8 %v996
          %v998 = vlaneseq
          %v999 = vshrl.u32 %v998, 7
          %v1000 = vsub.s32 %v997, %v999
          %v1001 = vrot.slane %v987, %v1000
          %v1002 = vcombine.high %v978, 0.0
          %v1003 = vcombine.high %v985, 0.0
          %v1004 = vcombine.high %v994, 0.0
          %v1005 = vcombine.high %v1001, 0.0
          %v1006 = vcombine.low %v978, %v985
          %v1008 = vunpack.c.l.s4 1983009808
          %v1009 = vunpack.c.0.s8 %v1008
          %v1010 = vlaneseq
          %v1011 = vshrl.u32 %v1010, 7
          %v1012 = vsub.s32 %v1009, %v1011
          %v1013 = vrot.slane %v1006, %v1012
          %v1014 = vcombine.low %v1002, %v1003
          %v1016 = vunpack.c.l.s4 1983009808
          %v1017 = vunpack.c.0.s8 %v1016
          %v1018 = vlaneseq
          %v1019 = vshrl.u32 %v1018, 7
          %v1020 = vsub.s32 %v1017, %v1019
          %v1021 = vrot.slane %v1014, %v1020
          %v1022 = vcombine.low %v994, %v1001
          %v1024 = vunpack.c.l.s4 1983009808
          %v1025 = vunpack.c.0.s8 %v1024
          %v1026 = vlaneseq
          %v1027 = vshrl.u32 %v1026, 7
          %v1028 = vsub.s32 %v1025, %v1027
          %v1029 = vrot.slane %v1022, %v1028
          %v1030 = vcombine.low %v1004, %v1005
          %v1032 = vunpack.c.l.s4 1983009808
          %v1033 = vunpack.c.0.s8 %v1032
          %v1034 = vlaneseq
          %v1035 = vshrl.u32 %v1034, 7
          %v1036 = vsub.s32 %v1033, %v1035
          %v1037 = vrot.slane %v1030, %v1036
          %v1038 = vcombine.low %v1013, %v1021
          %v1039 = vcombine.high %v1013, %v1021
          %v1041 = vunpack.c.l.s4 1934713408
          %v1042 = vunpack.c.0.s8 %v1041
          %v1043 = vlaneseq
          %v1044 = vshrl.u32 %v1043, 7
          %v1045 = vsub.s32 %v1042, %v1044
          %v1046 = vrot.slane %v1038, %v1045
          %v1048 = vunpack.c.l.s4 1934713408
          %v1049 = vunpack.c.0.s8 %v1048
          %v1050 = vlaneseq
          %v1051 = vshrl.u32 %v1050, 7
          %v1052 = vsub.s32 %v1049, %v1051
          %v1053 = vrot.slane %v1039, %v1052
          %v1054 = vcombine.low %v1029, %v1037
          %v1055 = vcombine.high %v1029, %v1037
          %v1057 = vunpack.c.l.s4 1934713408
          %v1058 = vunpack.c.0.s8 %v1057
          %v1059 = vlaneseq
          %v1060 = vshrl.u32 %v1059, 7
          %v1061 = vsub.s32 %v1058, %v1060
          %v1062 = vrot.slane %v1054, %v1061
          %v1064 = vunpack.c.l.s4 1934713408
          %v1065 = vunpack.c.0.s8 %v1064
          %v1066 = vlaneseq
          %v1067 = vshrl.u32 %v1066, 7
          %v1068 = vsub.s32 %v1065, %v1067
          %v1069 = vrot.slane %v1055, %v1068
          %v1070 = vcombine.low %v1046, %v1062
          %v1071 = vcombine.high %v1046, %v1062
          %v1072 = vcombine.low %v1053, %v1069
          %v1073 = vcombine.high %v1053, %v1069
          %v1074 = vpack.c.bf16 %v1070, %v1070
          %v1075 = vpack.c.bf16 %v1071, %v1071
          %v1076 = vpack.c.bf16 %v1072, %v1072
          %v1077 = vpack.c.bf16 %v1073, %v1073
          %1078 = vst.msk [vmem:[#allocation3] sm:$0xf] %vm914, %v1074
          %1079 = vst.msk [vmem:[#allocation3 + $0x4] sm:$0xf] %vm914, %v1075
          %1080 = vst.msk [vmem:[#allocation3 + $0x8] sm:$0xf] %vm914, %v1076
          %1081 = vst.msk [vmem:[#allocation3 + $0xc] sm:$0xf] %vm914, %v1077
          %1082 = vrot.lane.b32.xlu0 %v758, 64
          %v1083 = vpop.permute.xlu0 %1082
          %1084 = vrot.lane.b32.xlu0 %v921, 64
          %v1085 = vpop.permute.xlu0 %1084
          %1086 = vrot.lane.b32.xlu0 %v923, 64
          %v1087 = vpop.permute.xlu0 %1086
          %1088 = vrot.lane.b32.xlu0 %v925, 64
          %v1089 = vpop.permute.xlu0 %1088
          %v1094 = vcombine.low %v1083, %v1087
          %v1095 = vcombine.high %v1083, %v1087
          %v1097 = vunpack.c.l.s4 1983009808
          %v1098 = vunpack.c.0.s8 %v1097
          %v1099 = vlaneseq
          %v1100 = vshrl.u32 %v1099, 7
          %v1101 = vsub.s32 %v1098, %v1100
          %v1102 = vrot.slane %v1094, %v1101
          %v1104 = vunpack.c.l.s4 1983009808
          %v1105 = vunpack.c.0.s8 %v1104
          %v1106 = vlaneseq
          %v1107 = vshrl.u32 %v1106, 7
          %v1108 = vsub.s32 %v1105, %v1107
          %v1109 = vrot.slane %v1095, %v1108
          %v1110 = vcombine.low %v1085, %v1089
          %v1111 = vcombine.high %v1085, %v1089
          %v1113 = vunpack.c.l.s4 1983009808
          %v1114 = vunpack.c.0.s8 %v1113
          %v1115 = vlaneseq
          %v1116 = vshrl.u32 %v1115, 7
          %v1117 = vsub.s32 %v1114, %v1116
          %v1118 = vrot.slane %v1110, %v1117
          %v1120 = vunpack.c.l.s4 1983009808
          %v1121 = vunpack.c.0.s8 %v1120
          %v1122 = vlaneseq
          %v1123 = vshrl.u32 %v1122, 7
          %v1124 = vsub.s32 %v1121, %v1123
          %v1125 = vrot.slane %v1111, %v1124
          %v1126 = vcombine.low %v1102, %v1118
          %v1127 = vcombine.high %v1102, %v1118
          %v1129 = vunpack.c.l.s4 1934713408
          %v1130 = vunpack.c.0.s8 %v1129
          %v1131 = vlaneseq
          %v1132 = vshrl.u32 %v1131, 7
          %v1133 = vsub.s32 %v1130, %v1132
          %v1134 = vrot.slane %v1126, %v1133
          %v1136 = vunpack.c.l.s4 1934713408
          %v1137 = vunpack.c.0.s8 %v1136
          %v1138 = vlaneseq
          %v1139 = vshrl.u32 %v1138, 7
          %v1140 = vsub.s32 %v1137, %v1139
          %v1141 = vrot.slane %v1127, %v1140
          %v1142 = vcombine.low %v1109, %v1125
          %v1143 = vcombine.high %v1109, %v1125
          %v1145 = vunpack.c.l.s4 1934713408
          %v1146 = vunpack.c.0.s8 %v1145
          %v1147 = vlaneseq
          %v1148 = vshrl.u32 %v1147, 7
          %v1149 = vsub.s32 %v1146, %v1148
          %v1150 = vrot.slane %v1142, %v1149
          %v1152 = vunpack.c.l.s4 1934713408
          %v1153 = vunpack.c.0.s8 %v1152
          %v1154 = vlaneseq
          %v1155 = vshrl.u32 %v1154, 7
          %v1156 = vsub.s32 %v1153, %v1155
          %v1157 = vrot.slane %v1143, %v1156
          %v1158 = vcombine.high %v1134, 0.0
          %v1159 = vcombine.high %v1141, 0.0
          %v1160 = vcombine.high %v1150, 0.0
          %v1161 = vcombine.high %v1157, 0.0
          %v1162 = vcombine.low %v1134, %v1141
          %v1164 = vunpack.c.l.s4 1983009808
          %v1165 = vunpack.c.0.s8 %v1164
          %v1166 = vlaneseq
          %v1167 = vshrl.u32 %v1166, 7
          %v1168 = vsub.s32 %v1165, %v1167
          %v1169 = vrot.slane %v1162, %v1168
          %v1170 = vcombine.low %v1158, %v1159
          %v1172 = vunpack.c.l.s4 1983009808
          %v1173 = vunpack.c.0.s8 %v1172
          %v1174 = vlaneseq
          %v1175 = vshrl.u32 %v1174, 7
          %v1176 = vsub.s32 %v1173, %v1175
          %v1177 = vrot.slane %v1170, %v1176
          %v1178 = vcombine.low %v1150, %v1157
          %v1180 = vunpack.c.l.s4 1983009808
          %v1181 = vunpack.c.0.s8 %v1180
          %v1182 = vlaneseq
          %v1183 = vshrl.u32 %v1182, 7
          %v1184 = vsub.s32 %v1181, %v1183
          %v1185 = vrot.slane %v1178, %v1184
          %v1186 = vcombine.low %v1160, %v1161
          %v1188 = vunpack.c.l.s4 1983009808
          %v1189 = vunpack.c.0.s8 %v1188
          %v1190 = vlaneseq
          %v1191 = vshrl.u32 %v1190, 7
          %v1192 = vsub.s32 %v1189, %v1191
          %v1193 = vrot.slane %v1186, %v1192
          %v1194 = vcombine.low %v1169, %v1177
          %v1195 = vcombine.high %v1169, %v1177
          %v1197 = vunpack.c.l.s4 1934713408
          %v1198 = vunpack.c.0.s8 %v1197
          %v1199 = vlaneseq
          %v1200 = vshrl.u32 %v1199, 7
          %v1201 = vsub.s32 %v1198, %v1200
          %v1202 = vrot.slane %v1194, %v1201
          %v1204 = vunpack.c.l.s4 1934713408
          %v1205 = vunpack.c.0.s8 %v1204
          %v1206 = vlaneseq
          %v1207 = vshrl.u32 %v1206, 7
          %v1208 = vsub.s32 %v1205, %v1207
          %v1209 = vrot.slane %v1195, %v1208
          %v1210 = vcombine.low %v1185, %v1193
          %v1211 = vcombine.high %v1185, %v1193
          %v1213 = vunpack.c.l.s4 1934713408
          %v1214 = vunpack.c.0.s8 %v1213
          %v1215 = vlaneseq
          %v1216 = vshrl.u32 %v1215, 7
          %v1217 = vsub.s32 %v1214, %v1216
          %v1218 = vrot.slane %v1210, %v1217
          %v1220 = vunpack.c.l.s4 1934713408
          %v1221 = vunpack.c.0.s8 %v1220
          %v1222 = vlaneseq
          %v1223 = vshrl.u32 %v1222, 7
          %v1224 = vsub.s32 %v1221, %v1223
          %v1225 = vrot.slane %v1211, %v1224
          %v1226 = vcombine.low %v1202, %v1218
          %v1227 = vcombine.high %v1202, %v1218
          %v1228 = vcombine.low %v1209, %v1225
          %v1229 = vcombine.high %v1209, %v1225
          %v1230 = vpack.c.bf16 %v1226, %v1226
          %v1231 = vpack.c.bf16 %v1227, %v1227
          %v1232 = vpack.c.bf16 %v1228, %v1228
          %v1233 = vpack.c.bf16 %v1229, %v1229
          %1234 = vst.msk [vmem:[#allocation4] sm:$0xf] %vm914, %v1230
          %1235 = vst.msk [vmem:[#allocation4 + $0x4] sm:$0xf] %vm914, %v1231
          %1236 = vst.msk [vmem:[#allocation4 + $0x8] sm:$0xf] %vm914, %v1232
          %1237 = vst.msk [vmem:[#allocation4 + $0xc] sm:$0xf] %vm914, %v1233
        $region136: #{tpu_custom_call.1} parent=75 // pred_fallthru
          _
        %s1238 = smul.u32 %s45, 8
        %s1239 = scalar_lea.vmem %s584, %s1238 [#allocation5]
        %v1240 = vld [vmem:[%s1239] sm:$0xff]
        %s1241 = sshra.s32 %s1238, 3
        %s1242 = sand.u32 %s1238, 7
        %s1243 = smul.addr %s1241, 4
        %s1244 = scalar_lea.vmem [#allocation2], %s1243
        %v1245 = vld [vmem:[%s1244] sm:$0xf]
        %v1246 = vld [vmem:[%s1244 + $0x4] sm:$0xf]
        %v1247 = vld [vmem:[%s1244 + $0x8] sm:$0xf]
        %v1248 = vld [vmem:[%s1244 + $0xc] sm:$0xf]
        %v1249 = vld [vmem:[%s592] sm:$0x1]
        %v1250 = vld [vmem:[#allocation3] sm:$0xf]
        %v1251 = vld [vmem:[#allocation3 + $0x4] sm:$0xf]
        %v1252 = vld [vmem:[#allocation3 + $0x8] sm:$0xf]
        %v1253 = vld [vmem:[#allocation3 + $0xc] sm:$0xf]
        %v1255 = vlaneseq
        %v1256 = vshrl.u32 %v1255, 7
        %v1257 = vsub.s32 0, %v1256
        %v1258 = vrot.slane %v1249, %v1257
        %vm1260 = vcmask 64512
        %v1262 = vsel %vm1260, %v1245, 0
        %v1265 = vsel %vm1260, %v1250, 0
        %1267 = vmatprep.subr.bf16.mxu0 0
        %1268 = vmatpush1.bf16.xpose.msra.mxu0 %v1265
        %1269 = vmatprep.subr.bf16.mxu0 0
        %1270 = vmatpush1.bf16.xpose.msra.mxu0 0
        %1271 = vmatprep.subr.bf16.mxu0 0
        %1272 = vmatpush1.bf16.xpose.msra.mxu0 0
        %1273 = vmatprep.subr.bf16.mxu0 0
        %1274 = vmatpush1.bf16.xpose.msra.mxu0 0
        %1275 = vmatprep.subr.bf16.mxu0 0
        %1276 = vmatpush1.bf16.xpose.msra.mxu0 0
        %1277 = vmatprep.subr.bf16.mxu0 0
        %1278 = vmatpush1.bf16.xpose.msra.mxu0 0
        %1279 = vmatprep.subr.bf16.mxu0 0
        %1280 = vmatpush1.bf16.xpose.msra.mxu0 0
        %1281 = vmatprep.subr.bf16.mxu0 0
        %1282 = vmatpush1.bf16.xpose.msra.mxu0 0
        %1283 = vmatprep.subr.bf16.mxu0 0
        %1284 = vmatpush1.bf16.xpose.msra.mxu0 0
        %1285 = vmatprep.subr.bf16.mxu0 0
        %1286 = vmatpush1.bf16.xpose.msra.mxu0 0
        %1287 = vmatprep.subr.bf16.mxu0 0
        %1288 = vmatpush1.bf16.xpose.msra.mxu0 0
        %1289 = vmatprep.subr.bf16.mxu0 0
        %1290 = vmatpush1.bf16.xpose.msra.mxu0 0
        %1291 = vmatprep.subr.bf16.mxu0 0
        %1292 = vmatpush1.bf16.xpose.msra.mxu0 0
        %1293 = vmatprep.subr.bf16.mxu0 0
        %1294 = vmatpush1.bf16.xpose.msra.mxu0 0
        %1295 = vmatprep.subr.bf16.mxu0 0
        %1296 = vmatpush1.bf16.xpose.msra.mxu0 0
        %1297 = vmatprep.subr.bf16.mxu0 0
        %1298 = vmatpush1.bf16.xpose.msra.mxu0 0
        %1299 = vmatprep.mubr.bf16.mxu0 0
        %1300 = vmatmul.mubr.bf16.gmra.mrb[0].mxu0 %v1262
        %v1301 = vpop.f32.mrb[0].mxu0
        %v1302 = vadd.f32 %v1258, %v1301
        %v1303 = vpop.f32.mrb[0].mxu0
        %v1304 = vpop.f32.mrb[0].mxu0
        %v1305 = vpop.f32.mrb[0].mxu0
        %1306 = vdwg.mxu0
        %v1308 = vsel %vm1260, %v1246, 0
        %v1311 = vsel %vm1260, %v1251, 0
        %1313 = vmatprep.subr.bf16.mxu0 0
        %1314 = vmatpush1.bf16.xpose.msra.mxu0 %v1311
        %1315 = vmatprep.subr.bf16.mxu0 0
        %1316 = vmatpush1.bf16.xpose.msra.mxu0 0
        %1317 = vmatprep.subr.bf16.mxu0 0
        %1318 = vmatpush1.bf16.xpose.msra.mxu0 0
        %1319 = vmatprep.subr.bf16.mxu0 0
        %1320 = vmatpush1.bf16.xpose.msra.mxu0 0
        %1321 = vmatprep.subr.bf16.mxu0 0
        %1322 = vmatpush1.bf16.xpose.msra.mxu0 0
        %1323 = vmatprep.subr.bf16.mxu0 0
        %1324 = vmatpush1.bf16.xpose.msra.mxu0 0
        %1325 = vmatprep.subr.bf16.mxu0 0
        %1326 = vmatpush1.bf16.xpose.msra.mxu0 0
        %1327 = vmatprep.subr.bf16.mxu0 0
        %1328 = vmatpush1.bf16.xpose.msra.mxu0 0
        %1329 = vmatprep.subr.bf16.mxu0 0
        %1330 = vmatpush1.bf16.xpose.msra.mxu0 0
        %1331 = vmatprep.subr.bf16.mxu0 0
        %1332 = vmatpush1.bf16.xpose.msra.mxu0 0
        %1333 = vmatprep.subr.bf16.mxu0 0
        %1334 = vmatpush1.bf16.xpose.msra.mxu0 0
        %1335 = vmatprep.subr.bf16.mxu0 0
        %1336 = vmatpush1.bf16.xpose.msra.mxu0 0
        %1337 = vmatprep.subr.bf16.mxu0 0
        %1338 = vmatpush1.bf16.xpose.msra.mxu0 0
        %1339 = vmatprep.subr.bf16.mxu0 0
        %1340 = vmatpush1.bf16.xpose.msra.mxu0 0
        %1341 = vmatprep.subr.bf16.mxu0 0
        %1342 = vmatpush1.bf16.xpose.msra.mxu0 0
        %1343 = vmatprep.subr.bf16.mxu0 0
        %1344 = vmatpush1.bf16.xpose.msra.mxu0 0
        %1345 = vmatprep.mubr.bf16.mxu0 0
        %1346 = vmatmul.mubr.bf16.gmra.mrb[0].mxu0 %v1308
        %v1347 = vpop.f32.mrb[0].mxu0
        %v1348 = vadd.f32 %v1258, %v1347
        %v1349 = vpop.f32.mrb[0].mxu0
        %v1350 = vpop.f32.mrb[0].mxu0
        %v1351 = vpop.f32.mrb[0].mxu0
        %1352 = vdwg.mxu0
        %v1354 = vsel %vm1260, %v1247, 0
        %v1357 = vsel %vm1260, %v1252, 0
        %1359 = vmatprep.subr.bf16.mxu0 0
        %1360 = vmatpush1.bf16.xpose.msra.mxu0 %v1357
        %1361 = vmatprep.subr.bf16.mxu0 0
        %1362 = vmatpush1.bf16.xpose.msra.mxu0 0
        %1363 = vmatprep.subr.bf16.mxu0 0
        %1364 = vmatpush1.bf16.xpose.msra.mxu0 0
        %1365 = vmatprep.subr.bf16.mxu0 0
        %1366 = vmatpush1.bf16.xpose.msra.mxu0 0
        %1367 = vmatprep.subr.bf16.mxu0 0
        %1368 = vmatpush1.bf16.xpose.msra.mxu0 0
        %1369 = vmatprep.subr.bf16.mxu0 0
        %1370 = vmatpush1.bf16.xpose.msra.mxu0 0
        %1371 = vmatprep.subr.bf16.mxu0 0
        %1372 = vmatpush1.bf16.xpose.msra.mxu0 0
        %1373 = vmatprep.subr.bf16.mxu0 0
        %1374 = vmatpush1.bf16.xpose.msra.mxu0 0
        %1375 = vmatprep.subr.bf16.mxu0 0
        %1376 = vmatpush1.bf16.xpose.msra.mxu0 0
        %1377 = vmatprep.subr.bf16.mxu0 0
        %1378 = vmatpush1.bf16.xpose.msra.mxu0 0
        %1379 = vmatprep.subr.bf16.mxu0 0
        %1380 = vmatpush1.bf16.xpose.msra.mxu0 0
        %1381 = vmatprep.subr.bf16.mxu0 0
        %1382 = vmatpush1.bf16.xpose.msra.mxu0 0
        %1383 = vmatprep.subr.bf16.mxu0 0
        %1384 = vmatpush1.bf16.xpose.msra.mxu0 0
        %1385 = vmatprep.subr.bf16.mxu0 0
        %1386 = vmatpush1.bf16.xpose.msra.mxu0 0
        %1387 = vmatprep.subr.bf16.mxu0 0
        %1388 = vmatpush1.bf16.xpose.msra.mxu0 0
        %1389 = vmatprep.subr.bf16.mxu0 0
        %1390 = vmatpush1.bf16.xpose.msra.mxu0 0
        %1391 = vmatprep.mubr.bf16.mxu0 0
        %1392 = vmatmul.mubr.bf16.gmra.mrb[0].mxu0 %v1354
        %v1393 = vpop.f32.mrb[0].mxu0
        %v1394 = vadd.f32 %v1258, %v1393
        %v1395 = vpop.f32.mrb[0].mxu0
        %v1396 = vpop.f32.mrb[0].mxu0
        %v1397 = vpop.f32.mrb[0].mxu0
        %1398 = vdwg.mxu0
        %v1400 = vsel %vm1260, %v1248, 0
        %v1403 = vsel %vm1260, %v1253, 0
        %1405 = vmatprep.subr.bf16.mxu0 0
        %1406 = vmatpush1.bf16.xpose.msra.mxu0 %v1403
        %1407 = vmatprep.subr.bf16.mxu0 0
        %1408 = vmatpush1.bf16.xpose.msra.mxu0 0
        %1409 = vmatprep.subr.bf16.mxu0 0
        %1410 = vmatpush1.bf16.xpose.msra.mxu0 0
        %1411 = vmatprep.subr.bf16.mxu0 0
        %1412 = vmatpush1.bf16.xpose.msra.mxu0 0
        %1413 = vmatprep.subr.bf16.mxu0 0
        %1414 = vmatpush1.bf16.xpose.msra.mxu0 0
        %1415 = vmatprep.subr.bf16.mxu0 0
        %1416 = vmatpush1.bf16.xpose.msra.mxu0 0
        %1417 = vmatprep.subr.bf16.mxu0 0
        %1418 = vmatpush1.bf16.xpose.msra.mxu0 0
        %1419 = vmatprep.subr.bf16.mxu0 0
        %1420 = vmatpush1.bf16.xpose.msra.mxu0 0
        %1421 = vmatprep.subr.bf16.mxu0 0
        %1422 = vmatpush1.bf16.xpose.msra.mxu0 0
        %1423 = vmatprep.subr.bf16.mxu0 0
        %1424 = vmatpush1.bf16.xpose.msra.mxu0 0
        %1425 = vmatprep.subr.bf16.mxu0 0
        %1426 = vmatpush1.bf16.xpose.msra.mxu0 0
        %1427 = vmatprep.subr.bf16.mxu0 0
        %1428 = vmatpush1.bf16.xpose.msra.mxu0 0
        %1429 = vmatprep.subr.bf16.mxu0 0
        %1430 = vmatpush1.bf16.xpose.msra.mxu0 0
        %1431 = vmatprep.subr.bf16.mxu0 0
        %1432 = vmatpush1.bf16.xpose.msra.mxu0 0
        %1433 = vmatprep.subr.bf16.mxu0 0
        %1434 = vmatpush1.bf16.xpose.msra.mxu0 0
        %1435 = vmatprep.subr.bf16.mxu0 0
        %1436 = vmatpush1.bf16.xpose.msra.mxu0 0
        %1437 = vmatprep.mubr.bf16.mxu0 0
        %1438 = vmatmul.mubr.bf16.gmra.mrb[0].mxu0 %v1400
        %v1439 = vpop.f32.mrb[0].mxu0
        %v1440 = vadd.f32 %v1258, %v1439
        %v1441 = vpop.f32.mrb[0].mxu0
        %v1442 = vpop.f32.mrb[0].mxu0
        %v1443 = vpop.f32.mrb[0].mxu0
        %1444 = vdwg.mxu0
        %v1445 = vsel %vm1260, %v1302, -inf
        %1446 = vmax.xlane.f32.xlu0 %v1445
        %v1447 = vpop.xlane.xlu0 %1446
        %v1448 = vsel %vm1260, %v1348, -inf
        %1449 = vmax.xlane.f32.xlu0 %v1448
        %v1450 = vpop.xlane.xlu0 %1449
        %v1451 = vsel %vm1260, %v1394, -inf
        %1452 = vmax.xlane.f32.xlu0 %v1451
        %v1453 = vpop.xlane.xlu0 %1452
        %v1454 = vsel %vm1260, %v1440, -inf
        %1455 = vmax.xlane.f32.xlu0 %v1454
        %v1456 = vpop.xlane.xlu0 %1455
        %v1457 = vsub.f32 %v1302, %v1447
        %v1458 = vsub.f32 %v1348, %v1450
        %v1459 = vsub.f32 %v1394, %v1453
        %v1460 = vsub.f32 %v1440, %v1456
        %v1461 = vmul.f32 %v1457, 1.442695
        %v1462 = vpow.pop %v1461
        %v1463 = vmul.f32 %v1458, 1.442695
        %v1464 = vpow.pop %v1463
        %v1465 = vmul.f32 %v1459, 1.442695
        %v1466 = vpow.pop %v1465
        %v1467 = vmul.f32 %v1460, 1.442695
        %v1468 = vpow.pop %v1467
        %v1469 = vsel %vm1260, %v1462, 0.0
        %1470 = vadd.xlane.f32.xlu0 %v1469
        %v1471 = vpop.xlane.xlu0 %1470
        %v1472 = vsel %vm1260, %v1464, 0.0
        %1473 = vadd.xlane.f32.xlu0 %v1472
        %v1474 = vpop.xlane.xlu0 %1473
        %v1475 = vsel %vm1260, %v1466, 0.0
        %1476 = vadd.xlane.f32.xlu0 %v1475
        %v1477 = vpop.xlane.xlu0 %1476
        %v1478 = vsel %vm1260, %v1468, 0.0
        %1479 = vadd.xlane.f32.xlu0 %v1478
        %v1480 = vpop.xlane.xlu0 %1479
        %v1481 = vrcp.pop %v1471
        %v1482 = vrcp.pop %v1474
        %v1483 = vrcp.pop %v1477
        %v1484 = vrcp.pop %v1480
        %v1485 = vmul.f32 %v1462, %v1481
        %v1486 = vmul.f32 %v1464, %v1482
        %v1487 = vmul.f32 %v1466, %v1483
        %v1488 = vmul.f32 %v1468, %v1484
        %v1489 = vpack.c.bf16 %v1485, %v1485
        %v1490 = vpack.c.bf16 %v1486, %v1486
        %v1491 = vpack.c.bf16 %v1487, %v1487
        %v1492 = vpack.c.bf16 %v1488, %v1488
        %v1493 = vld [vmem:[#allocation4] sm:$0xf]
        %v1494 = vld [vmem:[#allocation4 + $0x4] sm:$0xf]
        %v1495 = vld [vmem:[#allocation4 + $0x8] sm:$0xf]
        %v1496 = vld [vmem:[#allocation4 + $0xc] sm:$0xf]
        %v1498 = vsel %vm1260, %v1489, 0
        %vm1500 = vcmask 1043456
        %v1502 = vsel %vm1500, %v1493, 0
        %1504 = vmatprep.subr.bf16.mxu0 0
        %1505 = vmatpush1.bf16.msra.mxu0 %v1502
        %1506 = vmatprep.subr.bf16.mxu0 0
        %1507 = vmatpush1.bf16.msra.mxu0 0
        %1508 = vmatprep.subr.bf16.mxu0 0
        %1509 = vmatpush1.bf16.msra.mxu0 0
        %1510 = vmatprep.subr.bf16.mxu0 0
        %1511 = vmatpush1.bf16.msra.mxu0 0
        %1512 = vmatprep.subr.bf16.mxu0 0
        %1513 = vmatpush1.bf16.msra.mxu0 0
        %1514 = vmatprep.subr.bf16.mxu0 0
        %1515 = vmatpush1.bf16.msra.mxu0 0
        %1516 = vmatprep.subr.bf16.mxu0 0
        %1517 = vmatpush1.bf16.msra.mxu0 0
        %1518 = vmatprep.subr.bf16.mxu0 0
        %1519 = vmatpush1.bf16.msra.mxu0 0
        %1520 = vmatprep.subr.bf16.mxu0 0
        %1521 = vmatpush1.bf16.msra.mxu0 0
        %1522 = vmatprep.subr.bf16.mxu0 0
        %1523 = vmatpush1.bf16.msra.mxu0 0
        %1524 = vmatprep.subr.bf16.mxu0 0
        %1525 = vmatpush1.bf16.msra.mxu0 0
        %1526 = vmatprep.subr.bf16.mxu0 0
        %1527 = vmatpush1.bf16.msra.mxu0 0
        %1528 = vmatprep.subr.bf16.mxu0 0
        %1529 = vmatpush1.bf16.msra.mxu0 0
        %1530 = vmatprep.subr.bf16.mxu0 0
        %1531 = vmatpush1.bf16.msra.mxu0 0
        %1532 = vmatprep.subr.bf16.mxu0 0
        %1533 = vmatpush1.bf16.msra.mxu0 0
        %1534 = vmatprep.subr.bf16.mxu0 0
        %1535 = vmatpush1.bf16.msra.mxu0 0
        %1536 = vmatprep.mubr.bf16.mxu0 0
        %1537 = vmatmul.mubr.bf16.gmra.mrb[0].mxu0 %v1498
        %v1538 = vpop.f32.mrb[0].mxu0
        %v1539 = vadd.f32 0.0, %v1538
        %v1540 = vpop.f32.mrb[0].mxu0
        %v1541 = vpop.f32.mrb[0].mxu0
        %v1542 = vpop.f32.mrb[0].mxu0
        %1543 = vdwg.mxu0
        %v1545 = vsel %vm1260, %v1490, 0
        %v1548 = vsel %vm1500, %v1494, 0
        %1550 = vmatprep.subr.bf16.mxu0 0
        %1551 = vmatpush1.bf16.msra.mxu0 %v1548
        %1552 = vmatprep.subr.bf16.mxu0 0
        %1553 = vmatpush1.bf16.msra.mxu0 0
        %1554 = vmatprep.subr.bf16.mxu0 0
        %1555 = vmatpush1.bf16.msra.mxu0 0
        %1556 = vmatprep.subr.bf16.mxu0 0
        %1557 = vmatpush1.bf16.msra.mxu0 0
        %1558 = vmatprep.subr.bf16.mxu0 0
        %1559 = vmatpush1.bf16.msra.mxu0 0
        %1560 = vmatprep.subr.bf16.mxu0 0
        %1561 = vmatpush1.bf16.msra.mxu0 0
        %1562 = vmatprep.subr.bf16.mxu0 0
        %1563 = vmatpush1.bf16.msra.mxu0 0
        %1564 = vmatprep.subr.bf16.mxu0 0
        %1565 = vmatpush1.bf16.msra.mxu0 0
        %1566 = vmatprep.subr.bf16.mxu0 0
        %1567 = vmatpush1.bf16.msra.mxu0 0
        %1568 = vmatprep.subr.bf16.mxu0 0
        %1569 = vmatpush1.bf16.msra.mxu0 0
        %1570 = vmatprep.subr.bf16.mxu0 0
        %1571 = vmatpush1.bf16.msra.mxu0 0
        %1572 = vmatprep.subr.bf16.mxu0 0
        %1573 = vmatpush1.bf16.msra.mxu0 0
        %1574 = vmatprep.subr.bf16.mxu0 0
        %1575 = vmatpush1.bf16.msra.mxu0 0
        %1576 = vmatprep.subr.bf16.mxu0 0
        %1577 = vmatpush1.bf16.msra.mxu0 0
        %1578 = vmatprep.subr.bf16.mxu0 0
        %1579 = vmatpush1.bf16.msra.mxu0 0
        %1580 = vmatprep.subr.bf16.mxu0 0
        %1581 = vmatpush1.bf16.msra.mxu0 0
        %1582 = vmatprep.mubr.bf16.mxu0 0
        %1583 = vmatmul.mubr.bf16.gmra.mrb[0].mxu0 %v1545
        %v1584 = vpop.f32.mrb[0].mxu0
        %v1585 = vadd.f32 0.0, %v1584
        %v1586 = vpop.f32.mrb[0].mxu0
        %v1587 = vpop.f32.mrb[0].mxu0
        %v1588 = vpop.f32.mrb[0].mxu0
        %1589 = vdwg.mxu0
        %v1591 = vsel %vm1260, %v1491, 0
        %v1594 = vsel %vm1500, %v1495, 0
        %1596 = vmatprep.subr.bf16.mxu0 0
        %1597 = vmatpush1.bf16.msra.mxu0 %v1594
        %1598 = vmatprep.subr.bf16.mxu0 0
        %1599 = vmatpush1.bf16.msra.mxu0 0
        %1600 = vmatprep.subr.bf16.mxu0 0
        %1601 = vmatpush1.bf16.msra.mxu0 0
        %1602 = vmatprep.subr.bf16.mxu0 0
        %1603 = vmatpush1.bf16.msra.mxu0 0
        %1604 = vmatprep.subr.bf16.mxu0 0
        %1605 = vmatpush1.bf16.msra.mxu0 0
        %1606 = vmatprep.subr.bf16.mxu0 0
        %1607 = vmatpush1.bf16.msra.mxu0 0
        %1608 = vmatprep.subr.bf16.mxu0 0
        %1609 = vmatpush1.bf16.msra.mxu0 0
        %1610 = vmatprep.subr.bf16.mxu0 0
        %1611 = vmatpush1.bf16.msra.mxu0 0
        %1612 = vmatprep.subr.bf16.mxu0 0
        %1613 = vmatpush1.bf16.msra.mxu0 0
        %1614 = vmatprep.subr.bf16.mxu0 0
        %1615 = vmatpush1.bf16.msra.mxu0 0
        %1616 = vmatprep.subr.bf16.mxu0 0
        %1617 = vmatpush1.bf16.msra.mxu0 0
        %1618 = vmatprep.subr.bf16.mxu0 0
        %1619 = vmatpush1.bf16.msra.mxu0 0
        %1620 = vmatprep.subr.bf16.mxu0 0
        %1621 = vmatpush1.bf16.msra.mxu0 0
        %1622 = vmatprep.subr.bf16.mxu0 0
        %1623 = vmatpush1.bf16.msra.mxu0 0
        %1624 = vmatprep.subr.bf16.mxu0 0
        %1625 = vmatpush1.bf16.msra.mxu0 0
        %1626 = vmatprep.subr.bf16.mxu0 0
        %1627 = vmatpush1.bf16.msra.mxu0 0
        %1628 = vmatprep.mubr.bf16.mxu0 0
        %1629 = vmatmul.mubr.bf16.gmra.mrb[0].mxu0 %v1591
        %v1630 = vpop.f32.mrb[0].mxu0
        %v1631 = vadd.f32 0.0, %v1630
        %v1632 = vpop.f32.mrb[0].mxu0
        %v1633 = vpop.f32.mrb[0].mxu0
        %v1634 = vpop.f32.mrb[0].mxu0
        %1635 = vdwg.mxu0
        %v1637 = vsel %vm1260, %v1492, 0
        %v1640 = vsel %vm1500, %v1496, 0
        %1642 = vmatprep.subr.bf16.mxu0 0
        %1643 = vmatpush1.bf16.msra.mxu0 %v1640
        %1644 = vmatprep.subr.bf16.mxu0 0
        %1645 = vmatpush1.bf16.msra.mxu0 0
        %1646 = vmatprep.subr.bf16.mxu0 0
        %1647 = vmatpush1.bf16.msra.mxu0 0
        %1648 = vmatprep.subr.bf16.mxu0 0
        %1649 = vmatpush1.bf16.msra.mxu0 0
        %1650 = vmatprep.subr.bf16.mxu0 0
        %1651 = vmatpush1.bf16.msra.mxu0 0
        %1652 = vmatprep.subr.bf16.mxu0 0
        %1653 = vmatpush1.bf16.msra.mxu0 0
        %1654 = vmatprep.subr.bf16.mxu0 0
        %1655 = vmatpush1.bf16.msra.mxu0 0
        %1656 = vmatprep.subr.bf16.mxu0 0
        %1657 = vmatpush1.bf16.msra.mxu0 0
        %1658 = vmatprep.subr.bf16.mxu0 0
        %1659 = vmatpush1.bf16.msra.mxu0 0
        %1660 = vmatprep.subr.bf16.mxu0 0
        %1661 = vmatpush1.bf16.msra.mxu0 0
        %1662 = vmatprep.subr.bf16.mxu0 0
        %1663 = vmatpush1.bf16.msra.mxu0 0
        %1664 = vmatprep.subr.bf16.mxu0 0
        %1665 = vmatpush1.bf16.msra.mxu0 0
        %1666 = vmatprep.subr.bf16.mxu0 0
        %1667 = vmatpush1.bf16.msra.mxu0 0
        %1668 = vmatprep.subr.bf16.mxu0 0
        %1669 = vmatpush1.bf16.msra.mxu0 0
        %1670 = vmatprep.subr.bf16.mxu0 0
        %1671 = vmatpush1.bf16.msra.mxu0 0
        %1672 = vmatprep.subr.bf16.mxu0 0
        %1673 = vmatpush1.bf16.msra.mxu0 0
        %1674 = vmatprep.mubr.bf16.mxu0 0
        %1675 = vmatmul.mubr.bf16.gmra.mrb[0].mxu0 %v1637
        %v1676 = vpop.f32.mrb[0].mxu0
        %v1677 = vadd.f32 0.0, %v1676
        %v1678 = vpop.f32.mrb[0].mxu0
        %v1679 = vpop.f32.mrb[0].mxu0
        %v1680 = vpop.f32.mrb[0].mxu0
        %1681 = vdwg.mxu0
        %v1682 = vcombine.low %v1539, %v1631
        %v1683 = vcombine.high %v1539, %v1631
        %v1685 = vunpack.c.l.s4 1983009808
        %v1686 = vunpack.c.0.s8 %v1685
        %v1687 = vlaneseq
        %v1688 = vshrl.u32 %v1687, 7
        %v1689 = vsub.s32 %v1686, %v1688
        %v1690 = vrot.slane %v1682, %v1689
        %v1692 = vunpack.c.l.s4 1983009808
        %v1693 = vunpack.c.0.s8 %v1692
        %v1694 = vlaneseq
        %v1695 = vshrl.u32 %v1694, 7
        %v1696 = vsub.s32 %v1693, %v1695
        %v1697 = vrot.slane %v1683, %v1696
        %v1698 = vcombine.low %v1585, %v1677
        %v1699 = vcombine.high %v1585, %v1677
        %v1701 = vunpack.c.l.s4 1983009808
        %v1702 = vunpack.c.0.s8 %v1701
        %v1703 = vlaneseq
        %v1704 = vshrl.u32 %v1703, 7
        %v1705 = vsub.s32 %v1702, %v1704
        %v1706 = vrot.slane %v1698, %v1705
        %v1708 = vunpack.c.l.s4 1983009808
        %v1709 = vunpack.c.0.s8 %v1708
        %v1710 = vlaneseq
        %v1711 = vshrl.u32 %v1710, 7
        %v1712 = vsub.s32 %v1709, %v1711
        %v1713 = vrot.slane %v1699, %v1712
        %v1714 = vcombine.low %v1690, %v1706
        %v1715 = vcombine.high %v1690, %v1706
        %v1717 = vunpack.c.l.s4 1934713408
        %v1718 = vunpack.c.0.s8 %v1717
        %v1719 = vlaneseq
        %v1720 = vshrl.u32 %v1719, 7
        %v1721 = vsub.s32 %v1718, %v1720
        %v1722 = vrot.slane %v1714, %v1721
        %v1724 = vunpack.c.l.s4 1934713408
        %v1725 = vunpack.c.0.s8 %v1724
        %v1726 = vlaneseq
        %v1727 = vshrl.u32 %v1726, 7
        %v1728 = vsub.s32 %v1725, %v1727
        %v1729 = vrot.slane %v1715, %v1728
        %v1730 = vcombine.low %v1697, %v1713
        %v1731 = vcombine.high %v1697, %v1713
        %v1733 = vunpack.c.l.s4 1934713408
        %v1734 = vunpack.c.0.s8 %v1733
        %v1735 = vlaneseq
        %v1736 = vshrl.u32 %v1735, 7
        %v1737 = vsub.s32 %v1734, %v1736
        %v1738 = vrot.slane %v1730, %v1737
        %v1740 = vunpack.c.l.s4 1934713408
        %v1741 = vunpack.c.0.s8 %v1740
        %v1742 = vlaneseq
        %v1743 = vshrl.u32 %v1742, 7
        %v1744 = vsub.s32 %v1741, %v1743
        %v1745 = vrot.slane %v1731, %v1744
        %v1746 = vcombine.high %v1722, 0.0
        %v1747 = vcombine.high %v1729, 0.0
        %v1748 = vcombine.high %v1738, 0.0
        %v1749 = vcombine.high %v1745, 0.0
        %v1750 = vcombine.low %v1722, %v1729
        %v1752 = vunpack.c.l.s4 1983009808
        %v1753 = vunpack.c.0.s8 %v1752
        %v1754 = vlaneseq
        %v1755 = vshrl.u32 %v1754, 7
        %v1756 = vsub.s32 %v1753, %v1755
        %v1757 = vrot.slane %v1750, %v1756
        %v1758 = vcombine.low %v1746, %v1747
        %v1760 = vunpack.c.l.s4 1983009808
        %v1761 = vunpack.c.0.s8 %v1760
        %v1762 = vlaneseq
        %v1763 = vshrl.u32 %v1762, 7
        %v1764 = vsub.s32 %v1761, %v1763
        %v1765 = vrot.slane %v1758, %v1764
        %v1766 = vcombine.low %v1738, %v1745
        %v1768 = vunpack.c.l.s4 1983009808
        %v1769 = vunpack.c.0.s8 %v1768
        %v1770 = vlaneseq
        %v1771 = vshrl.u32 %v1770, 7
        %v1772 = vsub.s32 %v1769, %v1771
        %v1773 = vrot.slane %v1766, %v1772
        %v1774 = vcombine.low %v1748, %v1749
        %v1776 = vunpack.c.l.s4 1983009808
        %v1777 = vunpack.c.0.s8 %v1776
        %v1778 = vlaneseq
        %v1779 = vshrl.u32 %v1778, 7
        %v1780 = vsub.s32 %v1777, %v1779
        %v1781 = vrot.slane %v1774, %v1780
        %v1782 = vcombine.low %v1757, %v1765
        %v1783 = vcombine.high %v1757, %v1765
        %v1785 = vunpack.c.l.s4 1934713408
        %v1786 = vunpack.c.0.s8 %v1785
        %v1787 = vlaneseq
        %v1788 = vshrl.u32 %v1787, 7
        %v1789 = vsub.s32 %v1786, %v1788
        %v1790 = vrot.slane %v1782, %v1789
        %v1792 = vunpack.c.l.s4 1934713408
        %v1793 = vunpack.c.0.s8 %v1792
        %v1794 = vlaneseq
        %v1795 = vshrl.u32 %v1794, 7
        %v1796 = vsub.s32 %v1793, %v1795
        %v1797 = vrot.slane %v1783, %v1796
        %v1798 = vcombine.low %v1773, %v1781
        %v1799 = vcombine.high %v1773, %v1781
        %v1801 = vunpack.c.l.s4 1934713408
        %v1802 = vunpack.c.0.s8 %v1801
        %v1803 = vlaneseq
        %v1804 = vshrl.u32 %v1803, 7
        %v1805 = vsub.s32 %v1802, %v1804
        %v1806 = vrot.slane %v1798, %v1805
        %v1808 = vunpack.c.l.s4 1934713408
        %v1809 = vunpack.c.0.s8 %v1808
        %v1810 = vlaneseq
        %v1811 = vshrl.u32 %v1810, 7
        %v1812 = vsub.s32 %v1809, %v1811
        %v1813 = vrot.slane %v1799, %v1812
        %v1814 = vcombine.low %v1790, %v1806
        %v1815 = vcombine.high %v1790, %v1806
        %v1816 = vcombine.low %v1797, %v1813
        %v1817 = vcombine.high %v1797, %v1813
        %1819 = vrot.lane.b32.xlu0 %v1815, 8
        %v1820 = vpop.permute.xlu0 %1819
        %1823 = vrot.lane.b32.xlu0 %v1816, 16
        %v1824 = vpop.permute.xlu0 %1823
        %1827 = vrot.lane.b32.xlu0 %v1817, 24
        %v1828 = vpop.permute.xlu0 %1827
        %v1830 = vsel %vm1260, %v1814, %v1820
        %vm1831 = vcmask 130048
        %v1832 = vsel %vm1831, %v1830, %v1824
        %vm1833 = vcmask 195584
        %v1834 = vsel %vm1833, %v1832, %v1828
        %v1835 = vpack.c.bf16 %v1834, %v1834
        %v1836 = vld [vmem:[#allocation13] sm:$0xf]
        %v1837 = vld [vmem:[#allocation13 + $0x4] sm:$0xf]
        %v1838 = vld [vmem:[#allocation13 + $0x8] sm:$0xf]
        %v1839 = vld [vmem:[#allocation13 + $0xc] sm:$0xf]
        %v1840 = vld [vmem:[#allocation14] sm:$0x1]
        %v1842 = vlaneseq
        %v1843 = vshrl.u32 %v1842, 7
        %v1844 = vsub.s32 0, %v1843
        %v1845 = vrot.slane %v1840, %v1844
        %v1851 = vunpack.c.l.b16 %v1836
        %v1852 = vunpack.c.l.b16 %v1837
        %v1853 = vunpack.c.l.b16 %v1838
        %v1854 = vunpack.c.l.b16 %v1839
        %v1855 = vpack.c.b16 %v1852, %v1851
        %v1856 = vpack.c.b16 %v1854, %v1853
        %vm1859 = vcmask 261120
        %v1861 = vsel %vm1859, %v1835, 0
        %1863 = vmatprep.subr.bf16.mxu0 0
        %1864 = vmatpush1.bf16.msra.mxu0 %v1855
        %1865 = vmatprep.subr.bf16.mxu0 0
        %1866 = vmatpush1.bf16.msra.mxu0 %v1856
        %1867 = vmatprep.subr.bf16.mxu0 0
        %1868 = vmatpush1.bf16.msra.mxu0 0
        %1869 = vmatprep.subr.bf16.mxu0 0
        %1870 = vmatpush1.bf16.msra.mxu0 0
        %1871 = vmatprep.subr.bf16.mxu0 0
        %1872 = vmatpush1.bf16.msra.mxu0 0
        %1873 = vmatprep.subr.bf16.mxu0 0
        %1874 = vmatpush1.bf16.msra.mxu0 0
        %1875 = vmatprep.subr.bf16.mxu0 0
        %1876 = vmatpush1.bf16.msra.mxu0 0
        %1877 = vmatprep.subr.bf16.mxu0 0
        %1878 = vmatpush1.bf16.msra.mxu0 0
        %1879 = vmatprep.subr.bf16.mxu0 0
        %1880 = vmatpush1.bf16.msra.mxu0 0
        %1881 = vmatprep.subr.bf16.mxu0 0
        %1882 = vmatpush1.bf16.msra.mxu0 0
        %1883 = vmatprep.subr.bf16.mxu0 0
        %1884 = vmatpush1.bf16.msra.mxu0 0
        %1885 = vmatprep.subr.bf16.mxu0 0
        %1886 = vmatpush1.bf16.msra.mxu0 0
        %1887 = vmatprep.subr.bf16.mxu0 0
        %1888 = vmatpush1.bf16.msra.mxu0 0
        %1889 = vmatprep.subr.bf16.mxu0 0
        %1890 = vmatpush1.bf16.msra.mxu0 0
        %1891 = vmatprep.subr.bf16.mxu0 0
        %1892 = vmatpush1.bf16.msra.mxu0 0
        %1893 = vmatprep.subr.bf16.mxu0 0
        %1894 = vmatpush1.bf16.msra.mxu0 0
        %1895 = vmatprep.mubr.bf16.mxu0 0
        %1896 = vmatmul.mubr.bf16.gmra.mrb[0].mxu0 %v1861
        %v1897 = vpop.f32.mrb[0].mxu0
        %v1898 = vadd.f32 %v1845, %v1897
        %v1899 = vpop.f32.mrb[0].mxu0
        %v1900 = vpop.f32.mrb[0].mxu0
        %v1901 = vpop.f32.mrb[0].mxu0
        %1902 = vdwg.mxu0
        %v1903 = vadd.f32 %v1240, %v1898
        %v1904 = vld [vmem:[#allocation16] sm:$0x1]
        %v1905 = vld [vmem:[#allocation17] sm:$0x1]
        %v1906 = vsel %vm1859, %v1903, 0.0
        %1907 = vadd.xlane.f32.xlu0 %v1906
        %v1908 = vpop.xlane.xlu0 %1907
        %v1909 = vrcp.pop 32.0
        %v1910 = vmul.f32 %v1908, %v1909
        %v1911 = vsub.f32 %v1903, %v1910
        %v1912 = vmul.f32 %v1911, %v1911
        %v1913 = vsel %vm1859, %v1912, 0.0
        %1914 = vadd.xlane.f32.xlu0 %v1913
        %v1915 = vpop.xlane.xlu0 %1914
        %v1916 = vmul.f32 %v1915, %v1909
        %v1917 = vadd.f32 %v1916, 1e-05
        %v1918 = vrsqrt.pop %v1917
        %v1919 = vmul.f32 %v1911, %v1918
        %v1921 = vlaneseq
        %v1922 = vshrl.u32 %v1921, 7
        %v1923 = vsub.s32 0, %v1922
        %v1924 = vrot.slane %v1904, %v1923
        %v1926 = vmul.f32 %v1919, %v1924
        %v1928 = vlaneseq
        %v1929 = vshrl.u32 %v1928, 7
        %v1930 = vsub.s32 0, %v1929
        %v1931 = vrot.slane %v1905, %v1930
        %v1933 = vadd.f32 %v1926, %v1931
        %v1934 = vpack.c.bf16 %v1933, %v1933
        %v1935 = vld [vmem:[#allocation19] sm:$0xf]
        %v1936 = vld [vmem:[#allocation19 + $0x4] sm:$0xf]
        %v1937 = vld [vmem:[#allocation19 + $0x8] sm:$0xf]
        %v1938 = vld [vmem:[#allocation19 + $0xc] sm:$0xf]
        %v1939 = vld [vmem:[#allocation20] sm:$0x1]
        %v1941 = vlaneseq
        %v1942 = vshrl.u32 %v1941, 7
        %v1943 = vsub.s32 0, %v1942
        %v1944 = vrot.slane %v1939, %v1943
        %v1950 = vunpack.c.l.b16 %v1935
        %v1951 = vunpack.c.l.b16 %v1936
        %v1952 = vunpack.c.l.b16 %v1937
        %v1953 = vunpack.c.l.b16 %v1938
        %v1954 = vpack.c.b16 %v1951, %v1950
        %v1955 = vpack.c.b16 %v1953, %v1952
        %v1959 = vsel %vm1859, %v1934, 0
        %1961 = vmatprep.subr.bf16.mxu0 0
        %1962 = vmatpush1.bf16.msra.mxu0 %v1954
        %1963 = vmatprep.subr.bf16.mxu0 0
        %1964 = vmatpush1.bf16.msra.mxu0 %v1955
        %1965 = vmatprep.subr.bf16.mxu0 0
        %1966 = vmatpush1.bf16.msra.mxu0 0
        %1967 = vmatprep.subr.bf16.mxu0 0
        %1968 = vmatpush1.bf16.msra.mxu0 0
        %1969 = vmatprep.subr.bf16.mxu0 0
        %1970 = vmatpush1.bf16.msra.mxu0 0
        %1971 = vmatprep.subr.bf16.mxu0 0
        %1972 = vmatpush1.bf16.msra.mxu0 0
        %1973 = vmatprep.subr.bf16.mxu0 0
        %1974 = vmatpush1.bf16.msra.mxu0 0
        %1975 = vmatprep.subr.bf16.mxu0 0
        %1976 = vmatpush1.bf16.msra.mxu0 0
        %1977 = vmatprep.subr.bf16.mxu0 0
        %1978 = vmatpush1.bf16.msra.mxu0 0
        %1979 = vmatprep.subr.bf16.mxu0 0
        %1980 = vmatpush1.bf16.msra.mxu0 0
        %1981 = vmatprep.subr.bf16.mxu0 0
        %1982 = vmatpush1.bf16.msra.mxu0 0
        %1983 = vmatprep.subr.bf16.mxu0 0
        %1984 = vmatpush1.bf16.msra.mxu0 0
        %1985 = vmatprep.subr.bf16.mxu0 0
        %1986 = vmatpush1.bf16.msra.mxu0 0
        %1987 = vmatprep.subr.bf16.mxu0 0
        %1988 = vmatpush1.bf16.msra.mxu0 0
        %1989 = vmatprep.subr.bf16.mxu0 0
        %1990 = vmatpush1.bf16.msra.mxu0 0
        %1991 = vmatprep.subr.bf16.mxu0 0
        %1992 = vmatpush1.bf16.msra.mxu0 0
        %1993 = vmatprep.mubr.bf16.mxu0 0
        %1994 = vmatmul.mubr.bf16.gmra.mrb[0].mxu0 %v1959
        %v1995 = vpop.f32.mrb[0].mxu0
        %v1996 = vadd.f32 %v1944, %v1995
        %v1997 = vpop.f32.mrb[0].mxu0
        %v1998 = vpop.f32.mrb[0].mxu0
        %v1999 = vpop.f32.mrb[0].mxu0
        %2000 = vdwg.mxu0
        %v2001 = vmax.f32 %v1996, 0.0
        %v2002 = vpack.c.bf16 %v2001, %v2001
        %v2003 = vld [vmem:[#allocation22] sm:$0xf]
        %v2004 = vld [vmem:[#allocation22 + $0x4] sm:$0xf]
        %v2005 = vld [vmem:[#allocation22 + $0x8] sm:$0xf]
        %v2006 = vld [vmem:[#allocation22 + $0xc] sm:$0xf]
        %v2007 = vld [vmem:[#allocation22 + $0x10] sm:$0xf]
        %v2008 = vld [vmem:[#allocation22 + $0x14] sm:$0xf]
        %v2009 = vld [vmem:[#allocation22 + $0x18] sm:$0xf]
        %v2010 = vld [vmem:[#allocation22 + $0x1c] sm:$0xf]
        %v2011 = vld [vmem:[#allocation23] sm:$0x1]
        %v2013 = vlaneseq
        %v2014 = vshrl.u32 %v2013, 7
        %v2015 = vsub.s32 0, %v2014
        %v2016 = vrot.slane %v2011, %v2015
        %v2026 = vunpack.c.l.b16 %v2003
        %v2027 = vunpack.c.l.b16 %v2004
        %v2028 = vunpack.c.l.b16 %v2005
        %v2029 = vunpack.c.l.b16 %v2006
        %v2030 = vunpack.c.l.b16 %v2007
        %v2031 = vunpack.c.l.b16 %v2008
        %v2032 = vunpack.c.l.b16 %v2009
        %v2033 = vunpack.c.l.b16 %v2010
        %v2034 = vpack.c.b16 %v2027, %v2026
        %v2035 = vpack.c.b16 %v2029, %v2028
        %v2036 = vpack.c.b16 %v2031, %v2030
        %v2037 = vpack.c.b16 %v2033, %v2032
        %vm2042 = vcmask 523264
        %v2044 = vsel %vm2042, %v2002, 0
        %2046 = vmatprep.subr.bf16.mxu0 0
        %2047 = vmatpush1.bf16.msra.mxu0 %v2034
        %2048 = vmatprep.subr.bf16.mxu0 0
        %2049 = vmatpush1.bf16.msra.mxu0 %v2035
        %2050 = vmatprep.subr.bf16.mxu0 0
        %2051 = vmatpush1.bf16.msra.mxu0 %v2036
        %2052 = vmatprep.subr.bf16.mxu0 0
        %2053 = vmatpush1.bf16.msra.mxu0 %v2037
        %2054 = vmatprep.subr.bf16.mxu0 0
        %2055 = vmatpush1.bf16.msra.mxu0 0
        %2056 = vmatprep.subr.bf16.mxu0 0
        %2057 = vmatpush1.bf16.msra.mxu0 0
        %2058 = vmatprep.subr.bf16.mxu0 0
        %2059 = vmatpush1.bf16.msra.mxu0 0
        %2060 = vmatprep.subr.bf16.mxu0 0
        %2061 = vmatpush1.bf16.msra.mxu0 0
        %2062 = vmatprep.subr.bf16.mxu0 0
        %2063 = vmatpush1.bf16.msra.mxu0 0
        %2064 = vmatprep.subr.bf16.mxu0 0
        %2065 = vmatpush1.bf16.msra.mxu0 0
        %2066 = vmatprep.subr.bf16.mxu0 0
        %2067 = vmatpush1.bf16.msra.mxu0 0
        %2068 = vmatprep.subr.bf16.mxu0 0
        %2069 = vmatpush1.bf16.msra.mxu0 0
        %2070 = vmatprep.subr.bf16.mxu0 0
        %2071 = vmatpush1.bf16.msra.mxu0 0
        %2072 = vmatprep.subr.bf16.mxu0 0
        %2073 = vmatpush1.bf16.msra.mxu0 0
        %2074 = vmatprep.subr.bf16.mxu0 0
        %2075 = vmatpush1.bf16.msra.mxu0 0
        %2076 = vmatprep.subr.bf16.mxu0 0
        %2077 = vmatpush1.bf16.msra.mxu0 0
        %2078 = vmatprep.mubr.bf16.mxu0 0
        %2079 = vmatmul.mubr.bf16.gmra.mrb[0].mxu0 %v2044
        %v2080 = vpop.f32.mrb[0].mxu0
        %v2081 = vadd.f32 %v2016, %v2080
        %v2082 = vpop.f32.mrb[0].mxu0
        %v2083 = vpop.f32.mrb[0].mxu0
        %v2084 = vpop.f32.mrb[0].mxu0
        %2085 = vdwg.mxu0
        %v2086 = vadd.f32 %v1933, %v2081
        %v2087 = vld [vmem:[#allocation25] sm:$0x1]
        %v2088 = vld [vmem:[#allocation26] sm:$0x1]
        %v2089 = vsel %vm1859, %v2086, 0.0
        %2090 = vadd.xlane.f32.xlu0 %v2089
        %v2091 = vpop.xlane.xlu0 %2090
        %v2092 = vmul.f32 %v2091, %v1909
        %v2093 = vsub.f32 %v2086, %v2092
        %v2094 = vmul.f32 %v2093, %v2093
        %v2095 = vsel %vm1859, %v2094, 0.0
        %2096 = vadd.xlane.f32.xlu0 %v2095
        %v2097 = vpop.xlane.xlu0 %2096
        %v2098 = vmul.f32 %v2097, %v1909
        %v2099 = vadd.f32 %v2098, 1e-05
        %v2100 = vrsqrt.pop %v2099
        %v2101 = vmul.f32 %v2093, %v2100
        %v2103 = vlaneseq
        %v2104 = vshrl.u32 %v2103, 7
        %v2105 = vsub.s32 0, %v2104
        %v2106 = vrot.slane %v2087, %v2105
        %v2108 = vmul.f32 %v2101, %v2106
        %v2110 = vlaneseq
        %v2111 = vshrl.u32 %v2110, 7
        %v2112 = vsub.s32 0, %v2111
        %v2113 = vrot.slane %v2088, %v2112
        %v2115 = vadd.f32 %v2108, %v2113
        %2116 = vst.msk [vmem:[%s688] sm:$0xff] %vm1859, %v2115
        %s2117 = sand.u32 %s366, 1
        %s2118 = scalar_lea.sflag [#allocation7], %s2117
        %s2119 = sand.u32 %s366, 1
        %s2120 = smul.addr %s2119, 8
        %s2121 = scalar_lea.vmem [#allocation28], %s2120
        // Predicated region
        $region137: #{tpu_custom_call.1} parent=75 // pred_check
          %p2122 = pneg %p376
        $region138: #{tpu_custom_call.1} parent=75 // pred_check_branch
          %2124 = sbr.rel (%p2122) target = $region140
        $region139: #{tpu_custom_call.1} parent=75 // pred_region
          %s2126 = ssub.s32 128, 128
          %2127 = vsyncadd %s2118, %s2126
          %s2128 = sadd.s32 %s45, %s44
          %s2129 = smul.addr %s2128, 128
          %s2130 = scalar_lea.hbm %s14, %s2129
          %s2132 = sshll.u32 %s2121, 4
          %s2133 = int_to_ptr.vmem [resolvable:$true] %s2132
          %2135 = dma.vmem_to_hbm [thread:$0]  %s2133, 128, %s2130, %s2118
        $region140: #{tpu_custom_call.1} parent=75 // pred_fallthru
          _
      $region76: #{tpu_custom_call.1} parent=5 // pred_fallthru
        _
      %p2136 = scmp.le.s32.totalorder 2, %s35
      // Predicated region
      $region141: #{tpu_custom_call.1} parent=5 // pred_check
        %p2137 = pneg %p2136
      $region142: #{tpu_custom_call.1} parent=5 // pred_check_branch
        %2139 = sbr.rel (%p2137) target = $region144
      $region143: #{tpu_custom_call.1} parent=5 // pred_region
        %s2140 = ssub.s32 %s35, 2
        // Predicated region
        $region145: #{tpu_custom_call.1} parent=143 // pred_check
          %p2141 = pneg %p382
        $region146: #{tpu_custom_call.1} parent=143 // pred_check_branch
          %2143 = sbr.rel (%p2141) target = $region148
        $region147: #{tpu_custom_call.1} parent=143 // pred_region
          %s2144 = sand.u32 %s367, 1
          %s2145 = scalar_lea.sflag [#allocation7], %s2144
          %s2146 = sand.u32 %s367, 1
          %s2147 = smul.addr %s2146, 8
          %s2148 = scalar_lea.vmem [#allocation28], %s2147
          %2149 = dma.done %s2145, 128
        $region148: #{tpu_custom_call.1} parent=143 // pred_fallthru
          _
      $region144: #{tpu_custom_call.1} parent=5 // pred_fallthru
        _
    $region6: #{tpu_custom_call.1} parent=1 // loop_footer
      %s39 = sadd.s32 1, %s35
    $region7: #{tpu_custom_call.1} parent=1 // loop_footer_branch
      %34 = sbr.rel target = $region3
    $region8: #{tpu_custom_call.1} parent=1 // loop_exit
      _
    %2150 = vsyncpa [#allocation6], 1
    %s2151 = scalar_lea.sflag [#allocation6], 1
    %2152 = vsyncpa %s2151, 1
    %2153 = vsyncpa [#allocation9], 1
    %s2154 = scalar_lea.sflag [#allocation9], 1
    %2155 = vsyncpa %s2154, 1
    %2156 = vsyncpa [#allocation12], 1
    %2157 = vsyncpa [#allocation15], 1
    %2158 = vsyncpa [#allocation18], 1
    %2159 = vsyncpa [#allocation21], 1
    %2160 = vsyncpa [#allocation24], 1
    %2161 = vsyncpa [#allocation27], 1
    %2162 = vsyncpa [#allocation7], 1
    %s2163 = scalar_lea.sflag [#allocation7], 1
    %2164 = vsyncpa %s2163, 1

</llo_original>
